<compile_context>
chip_gen: v5e
topology: v5e:2x2
jax: 0.10.0
libtpu: 0.0.40
codegen_flags: <defaults>
</compile_context>

<pallas_src>
import functools

import jax
import jax.numpy as jnp
from jax.experimental import pallas as pl
from jax.experimental.pallas import tpu as pltpu


def _rae_kernel(x_ref,
                we1_ref, be1_ref, we2_ref, be2_ref, we3_ref, be3_ref,
                wd1_ref, bd1_ref, wd2_ref, bd2_ref, wd3_ref, bd3_ref,
                recon_ref):
    """One batch tile of the autoencoder forward (6 matmuls + ReLU/sigmoid)."""
    x = x_ref[...]

    # ---------------- Encoder ----------------
    h = jnp.maximum(
        jnp.dot(x, we1_ref[...], preferred_element_type=jnp.float32) + be1_ref[...], 0.0)
    h = jnp.maximum(
        jnp.dot(h, we2_ref[...], preferred_element_type=jnp.float32) + be2_ref[...], 0.0)
    z = jnp.maximum(
        jnp.dot(h, we3_ref[...], preferred_element_type=jnp.float32) + be3_ref[...], 0.0)

    # ---------------- Decoder ----------------
    d = jnp.maximum(
        jnp.dot(z, wd1_ref[...], preferred_element_type=jnp.float32) + bd1_ref[...], 0.0)
    d = jnp.maximum(
        jnp.dot(d, wd2_ref[...], preferred_element_type=jnp.float32) + bd2_ref[...], 0.0)
    logits = jnp.dot(d, wd3_ref[...], preferred_element_type=jnp.float32) + bd3_ref[...]
    recon_ref[...] = jax.nn.sigmoid(logits).astype(recon_ref.dtype)


_PARAM_ORDER = ("we1", "be1", "we2", "be2", "we3", "be3",
                "wd1", "bd1", "wd2", "bd2", "wd3", "bd3")
_DECODER_PARAMS = ("wd1", "bd1", "wd2", "bd2", "wd3", "bd3")


def rae_forward(x, params, l2_lambda, *, tile_b=512,
                vmem_limit_bytes=32 * 1024 * 1024):
    """Forward pass. params: weights already (in, out), biases (1, out).

    Returns (recon, l2_penalty) exactly like the PyTorch module."""
    B, input_dim = x.shape

    # ---- pick an effective batch tile and pad B up to a multiple of it ----
    if B >= tile_b:
        eff_tile = tile_b
    else:
        eff_tile = max(8, ((B + 7) // 8) * 8)   # at least one (8,·) sublane tile
    Bp = ((B + eff_tile - 1) // eff_tile) * eff_tile
    if Bp != B:
        x_in = jnp.pad(x, ((0, Bp - B), (0, 0)))
    else:
        x_in = x
    grid = (Bp // eff_tile,)

    # ---- BlockSpecs: activations tiled over batch, params resident ----
    x_spec = pl.BlockSpec((eff_tile, input_dim), lambda i: (i, 0))
    out_spec = pl.BlockSpec((eff_tile, input_dim), lambda i: (i, 0))

    def _resident(shape):
        return pl.BlockSpec(shape, lambda i: (0, 0))

    param_args = tuple(params[name] for name in _PARAM_ORDER)
    param_specs = [_resident(params[name].shape) for name in _PARAM_ORDER]

    recon_padded = pl.pallas_call(
        _rae_kernel,
        out_shape=jax.ShapeDtypeStruct((Bp, input_dim), jnp.float32),
        grid=grid,
        in_specs=[x_spec] + param_specs,
        out_specs=out_spec,
        compiler_params=pltpu.CompilerParams(
            dimension_semantics=("parallel",),
            vmem_limit_bytes=vmem_limit_bytes,
        ),
    )(x_in, *param_args)

    recon = recon_padded[:B] if Bp != B else recon_padded

    # ---- decoder L2 penalty: batch-independent -> computed in the wrapper ----
    l2 = sum(jnp.sum(params[n].astype(jnp.float32) ** 2) for n in _DECODER_PARAMS)
    l2_penalty = jnp.float32(l2_lambda) * l2
    return recon, l2_penalty


def init_params(key, input_dim, hidden_dims, latent_dim):
    """Matches PyTorch init: weight ~ N(0, 0.1^2), bias = 0.

    PyTorch Linear weight is (out, in); we store its transpose (in, out)."""
    shapes = {
        # encoder
        "we1": (input_dim, hidden_dims[0]),
        "we2": (hidden_dims[0], hidden_dims[1]),
        "we3": (hidden_dims[1], latent_dim),
        # decoder
        "wd1": (latent_dim, hidden_dims[1]),
        "wd2": (hidden_dims[1], hidden_dims[0]),
        "wd3": (hidden_dims[0], input_dim),
    }
    params = {}
    keys = jax.random.split(key, len(shapes))
    for k, (name, shp) in zip(keys, sorted(shapes.items())):
        params[name] = (0.1 * jax.random.normal(k, shp)).astype(jnp.float32)
    for name, shp in shapes.items():
        params["b" + name[1:]] = jnp.zeros((1, shp[1]), dtype=jnp.float32)
    return params


def rae_reference(x, params, l2_lambda):
    """Pure-JAX reference of the same forward for sanity checking."""
    h = jax.nn.relu(x @ params["we1"] + params["be1"])
    h = jax.nn.relu(h @ params["we2"] + params["be2"])
    z = jax.nn.relu(h @ params["we3"] + params["be3"])
    d = jax.nn.relu(z @ params["wd1"] + params["bd1"])
    d = jax.nn.relu(d @ params["wd2"] + params["bd2"])
    recon = jax.nn.sigmoid(d @ params["wd3"] + params["bd3"])
    l2 = sum(jnp.sum(params[n] ** 2) for n in _DECODER_PARAMS)
    return recon, l2_lambda * l2


if __name__ == "__main__":
    # Small-but-tileable shapes: grid of 2 batch tiles exercises the pipeline.
    batch = 256
    input_dim = 64
    hidden_dims = [32, 16]
    latent_dim = 8
    l2_lambda = 0.01
    tile_b = 128

    key = jax.random.PRNGKey(0)
    k_x, k_p = jax.random.split(key)
    x = jax.random.normal(k_x, (batch, input_dim), dtype=jnp.float32)
    params = init_params(k_p, input_dim, hidden_dims, latent_dim)

    recon, l2 = rae_forward(x, params, l2_lambda, tile_b=tile_b)
    recon = jax.block_until_ready(recon)
    l2 = jax.block_until_ready(l2)

    recon_ref, l2_ref = rae_reference(x, params, l2_lambda)
    assert recon.shape == (batch, input_dim), recon.shape
    assert jnp.allclose(recon, recon_ref, atol=1e-5), "recon mismatch"
    assert jnp.allclose(l2, l2_ref, atol=1e-5), "l2 penalty mismatch"

    # Also exercise the non-tile-multiple / tiny-batch path.
    recon_small, l2_small = rae_forward(x[:9], params, l2_lambda, tile_b=tile_b)
    recon_small = jax.block_until_ready(recon_small)
    assert recon_small.shape == (9, input_dim)
    assert jnp.allclose(recon_small, recon_ref[:9], atol=1e-5), "small-batch mismatch"

    print("KERNEL_OK")
</pallas_src>

<mosaic_0001>
module attributes {stable_mosaic.version = 11 : i64} {
  func.func @_rae_kernel(%arg0: i32, %arg1: memref<128x64xf32, #tpu.memory_space<vmem>>, %arg2: memref<64x32xf32, #tpu.memory_space<vmem>>, %arg3: memref<1x32xf32, #tpu.memory_space<vmem>>, %arg4: memref<32x16xf32, #tpu.memory_space<vmem>>, %arg5: memref<1x16xf32, #tpu.memory_space<vmem>>, %arg6: memref<16x8xf32, #tpu.memory_space<vmem>>, %arg7: memref<1x8xf32, #tpu.memory_space<vmem>>, %arg8: memref<8x16xf32, #tpu.memory_space<vmem>>, %arg9: memref<1x16xf32, #tpu.memory_space<vmem>>, %arg10: memref<16x32xf32, #tpu.memory_space<vmem>>, %arg11: memref<1x32xf32, #tpu.memory_space<vmem>>, %arg12: memref<32x64xf32, #tpu.memory_space<vmem>>, %arg13: memref<1x64xf32, #tpu.memory_space<vmem>>, %arg14: memref<128x64xf32, #tpu.memory_space<vmem>>) attributes {dimension_semantics = [#tpu.dimension_semantics<parallel>], iteration_bounds = array<i64: 2>, scalar_prefetch = 0 : i64, scratch_operands = 0 : i64, tpu.core_type = #tpu.core_type<tc>, window_params = [{transform_indices = @transform_0, window_bounds = array<i64: 128, 64>}, {pipeline_mode = #tpu.pipeline_mode<synchronous>, transform_indices = @transform_1, window_bounds = array<i64: 64, 32>}, {pipeline_mode = #tpu.pipeline_mode<synchronous>, transform_indices = @transform_2, window_bounds = array<i64: 1, 32>}, {pipeline_mode = #tpu.pipeline_mode<synchronous>, transform_indices = @transform_3, window_bounds = array<i64: 32, 16>}, {pipeline_mode = #tpu.pipeline_mode<synchronous>, transform_indices = @transform_4, window_bounds = array<i64: 1, 16>}, {pipeline_mode = #tpu.pipeline_mode<synchronous>, transform_indices = @transform_5, window_bounds = array<i64: 16, 8>}, {pipeline_mode = #tpu.pipeline_mode<synchronous>, transform_indices = @transform_6, window_bounds = array<i64: 1, 8>}, {pipeline_mode = #tpu.pipeline_mode<synchronous>, transform_indices = @transform_7, window_bounds = array<i64: 8, 16>}, {pipeline_mode = #tpu.pipeline_mode<synchronous>, transform_indices = @transform_8, window_bounds = array<i64: 1, 16>}, {pipeline_mode = #tpu.pipeline_mode<synchronous>, transform_indices = @transform_9, window_bounds = array<i64: 16, 32>}, {pipeline_mode = #tpu.pipeline_mode<synchronous>, transform_indices = @transform_10, window_bounds = array<i64: 1, 32>}, {pipeline_mode = #tpu.pipeline_mode<synchronous>, transform_indices = @transform_11, window_bounds = array<i64: 32, 64>}, {pipeline_mode = #tpu.pipeline_mode<synchronous>, transform_indices = @transform_12, window_bounds = array<i64: 1, 64>}, {transform_indices = @transform_13, window_bounds = array<i64: 128, 64>}]} {
    %c0 = arith.constant 0 : index
    %c0_0 = arith.constant 0 : index
    %0 = vector.load %arg1[%c0, %c0_0] : memref<128x64xf32, #tpu.memory_space<vmem>>, vector<128x64xf32>
    %c0_1 = arith.constant 0 : index
    %c0_2 = arith.constant 0 : index
    %1 = vector.load %arg2[%c0_1, %c0_2] : memref<64x32xf32, #tpu.memory_space<vmem>>, vector<64x32xf32>
    %cst = arith.constant dense<0.000000e+00> : vector<128x32xf32>
    %2 = tpu.matmul %0, %1, %cst {dimension_numbers = #tpu.dot_dimension_numbers<[1], [0], [0], [1], [0, 0, 1, 1], [], []>} : vector<128x64xf32>, vector<64x32xf32>, vector<128x32xf32> -> vector<128x32xf32>
    %c0_3 = arith.constant 0 : index
    %c0_4 = arith.constant 0 : index
    %3 = vector.load %arg3[%c0_3, %c0_4] : memref<1x32xf32, #tpu.memory_space<vmem>>, vector<1x32xf32>
    %4 = vector.broadcast %3 : vector<1x32xf32> to vector<128x32xf32>
    %5 = arith.addf %2, %4 : vector<128x32xf32>
    %cst_5 = arith.constant 0.000000e+00 : f32
    %6 = vector.broadcast %cst_5 : f32 to vector<128x32xf32>
    %7 = arith.maximumf %5, %6 : vector<128x32xf32>
    %c0_6 = arith.constant 0 : index
    %c0_7 = arith.constant 0 : index
    %8 = vector.load %arg4[%c0_6, %c0_7] : memref<32x16xf32, #tpu.memory_space<vmem>>, vector<32x16xf32>
    %cst_8 = arith.constant dense<0.000000e+00> : vector<128x16xf32>
    %9 = tpu.matmul %7, %8, %cst_8 {dimension_numbers = #tpu.dot_dimension_numbers<[1], [0], [0], [1], [0, 0, 1, 1], [], []>} : vector<128x32xf32>, vector<32x16xf32>, vector<128x16xf32> -> vector<128x16xf32>
    %c0_9 = arith.constant 0 : index
    %c0_10 = arith.constant 0 : index
    %10 = vector.load %arg5[%c0_9, %c0_10] : memref<1x16xf32, #tpu.memory_space<vmem>>, vector<1x16xf32>
    %11 = vector.broadcast %10 : vector<1x16xf32> to vector<128x16xf32>
    %12 = arith.addf %9, %11 : vector<128x16xf32>
    %cst_11 = arith.constant 0.000000e+00 : f32
    %13 = vector.broadcast %cst_11 : f32 to vector<128x16xf32>
    %14 = arith.maximumf %12, %13 : vector<128x16xf32>
    %c0_12 = arith.constant 0 : index
    %c0_13 = arith.constant 0 : index
    %15 = vector.load %arg6[%c0_12, %c0_13] : memref<16x8xf32, #tpu.memory_space<vmem>>, vector<16x8xf32>
    %cst_14 = arith.constant dense<0.000000e+00> : vector<128x8xf32>
    %16 = tpu.matmul %14, %15, %cst_14 {dimension_numbers = #tpu.dot_dimension_numbers<[1], [0], [0], [1], [0, 0, 1, 1], [], []>} : vector<128x16xf32>, vector<16x8xf32>, vector<128x8xf32> -> vector<128x8xf32>
    %c0_15 = arith.constant 0 : index
    %c0_16 = arith.constant 0 : index
    %17 = vector.load %arg7[%c0_15, %c0_16] : memref<1x8xf32, #tpu.memory_space<vmem>>, vector<1x8xf32>
    %18 = vector.broadcast %17 : vector<1x8xf32> to vector<128x8xf32>
    %19 = arith.addf %16, %18 : vector<128x8xf32>
    %cst_17 = arith.constant 0.000000e+00 : f32
    %20 = vector.broadcast %cst_17 : f32 to vector<128x8xf32>
    %21 = arith.maximumf %19, %20 : vector<128x8xf32>
    %c0_18 = arith.constant 0 : index
    %c0_19 = arith.constant 0 : index
    %22 = vector.load %arg8[%c0_18, %c0_19] : memref<8x16xf32, #tpu.memory_space<vmem>>, vector<8x16xf32>
    %cst_20 = arith.constant dense<0.000000e+00> : vector<128x16xf32>
    %23 = tpu.matmul %21, %22, %cst_20 {dimension_numbers = #tpu.dot_dimension_numbers<[1], [0], [0], [1], [0, 0, 1, 1], [], []>} : vector<128x8xf32>, vector<8x16xf32>, vector<128x16xf32> -> vector<128x16xf32>
    %c0_21 = arith.constant 0 : index
    %c0_22 = arith.constant 0 : index
    %24 = vector.load %arg9[%c0_21, %c0_22] : memref<1x16xf32, #tpu.memory_space<vmem>>, vector<1x16xf32>
    %25 = vector.broadcast %24 : vector<1x16xf32> to vector<128x16xf32>
    %26 = arith.addf %23, %25 : vector<128x16xf32>
    %cst_23 = arith.constant 0.000000e+00 : f32
    %27 = vector.broadcast %cst_23 : f32 to vector<128x16xf32>
    %28 = arith.maximumf %26, %27 : vector<128x16xf32>
    %c0_24 = arith.constant 0 : index
    %c0_25 = arith.constant 0 : index
    %29 = vector.load %arg10[%c0_24, %c0_25] : memref<16x32xf32, #tpu.memory_space<vmem>>, vector<16x32xf32>
    %cst_26 = arith.constant dense<0.000000e+00> : vector<128x32xf32>
    %30 = tpu.matmul %28, %29, %cst_26 {dimension_numbers = #tpu.dot_dimension_numbers<[1], [0], [0], [1], [0, 0, 1, 1], [], []>} : vector<128x16xf32>, vector<16x32xf32>, vector<128x32xf32> -> vector<128x32xf32>
    %c0_27 = arith.constant 0 : index
    %c0_28 = arith.constant 0 : index
    %31 = vector.load %arg11[%c0_27, %c0_28] : memref<1x32xf32, #tpu.memory_space<vmem>>, vector<1x32xf32>
    %32 = vector.broadcast %31 : vector<1x32xf32> to vector<128x32xf32>
    %33 = arith.addf %30, %32 : vector<128x32xf32>
    %cst_29 = arith.constant 0.000000e+00 : f32
    %34 = vector.broadcast %cst_29 : f32 to vector<128x32xf32>
    %35 = arith.maximumf %33, %34 : vector<128x32xf32>
    %c0_30 = arith.constant 0 : index
    %c0_31 = arith.constant 0 : index
    %36 = vector.load %arg12[%c0_30, %c0_31] : memref<32x64xf32, #tpu.memory_space<vmem>>, vector<32x64xf32>
    %cst_32 = arith.constant dense<0.000000e+00> : vector<128x64xf32>
    %37 = tpu.matmul %35, %36, %cst_32 {dimension_numbers = #tpu.dot_dimension_numbers<[1], [0], [0], [1], [0, 0, 1, 1], [], []>} : vector<128x32xf32>, vector<32x64xf32>, vector<128x64xf32> -> vector<128x64xf32>
    %c0_33 = arith.constant 0 : index
    %c0_34 = arith.constant 0 : index
    %38 = vector.load %arg13[%c0_33, %c0_34] : memref<1x64xf32, #tpu.memory_space<vmem>>, vector<1x64xf32>
    %39 = vector.broadcast %38 : vector<1x64xf32> to vector<128x64xf32>
    %40 = arith.addf %37, %39 : vector<128x64xf32>
    %41 = arith.negf %40 : vector<128x64xf32>
    %42 = math.exp %41 : vector<128x64xf32>
    %cst_35 = arith.constant 1.000000e+00 : f32
    %43 = vector.broadcast %cst_35 : f32 to vector<128x64xf32>
    %44 = arith.addf %43, %42 : vector<128x64xf32>
    %45 = arith.divf %43, %44 : vector<128x64xf32>
    %c0_36 = arith.constant 0 : index
    %c0_37 = arith.constant 0 : index
    %46 = vector.load %arg14[%c0_36, %c0_37] : memref<128x64xf32, #tpu.memory_space<vmem>>, vector<128x64xf32>
    tpu.vector_store %arg14[%c0_36, %c0_37], %45 {strides = array<i32>} : memref<128x64xf32, #tpu.memory_space<vmem>>, vector<128x64xf32>,
    return
  }
  func.func @transform_0(%arg0: i32) -> (i32, i32) {
    %c0_i32 = arith.constant 0 : i32
    %c0_i32_0 = arith.constant 0 : i32
    return %arg0, %c0_i32 : i32, i32
  }
  func.func @transform_1(%arg0: i32) -> (i32, i32) {
    %c0_i32 = arith.constant 0 : i32
    %c0_i32_0 = arith.constant 0 : i32
    %c0_i32_1 = arith.constant 0 : i32
    return %c0_i32, %c0_i32_0 : i32, i32
  }
  func.func @transform_2(%arg0: i32) -> (i32, i32) {
    %c0_i32 = arith.constant 0 : i32
    %c0_i32_0 = arith.constant 0 : i32
    %c0_i32_1 = arith.constant 0 : i32
    return %c0_i32, %c0_i32_0 : i32, i32
  }
  func.func @transform_3(%arg0: i32) -> (i32, i32) {
    %c0_i32 = arith.constant 0 : i32
    %c0_i32_0 = arith.constant 0 : i32
    %c0_i32_1 = arith.constant 0 : i32
    return %c0_i32, %c0_i32_0 : i32, i32
  }
  func.func @transform_4(%arg0: i32) -> (i32, i32) {
    %c0_i32 = arith.constant 0 : i32
    %c0_i32_0 = arith.constant 0 : i32
    %c0_i32_1 = arith.constant 0 : i32
    return %c0_i32, %c0_i32_0 : i32, i32
  }
  func.func @transform_5(%arg0: i32) -> (i32, i32) {
    %c0_i32 = arith.constant 0 : i32
    %c0_i32_0 = arith.constant 0 : i32
    %c0_i32_1 = arith.constant 0 : i32
    return %c0_i32, %c0_i32_0 : i32, i32
  }
  func.func @transform_6(%arg0: i32) -> (i32, i32) {
    %c0_i32 = arith.constant 0 : i32
    %c0_i32_0 = arith.constant 0 : i32
    %c0_i32_1 = arith.constant 0 : i32
    return %c0_i32, %c0_i32_0 : i32, i32
  }
  func.func @transform_7(%arg0: i32) -> (i32, i32) {
    %c0_i32 = arith.constant 0 : i32
    %c0_i32_0 = arith.constant 0 : i32
    %c0_i32_1 = arith.constant 0 : i32
    return %c0_i32, %c0_i32_0 : i32, i32
  }
  func.func @transform_8(%arg0: i32) -> (i32, i32) {
    %c0_i32 = arith.constant 0 : i32
    %c0_i32_0 = arith.constant 0 : i32
    %c0_i32_1 = arith.constant 0 : i32
    return %c0_i32, %c0_i32_0 : i32, i32
  }
  func.func @transform_9(%arg0: i32) -> (i32, i32) {
    %c0_i32 = arith.constant 0 : i32
    %c0_i32_0 = arith.constant 0 : i32
    %c0_i32_1 = arith.constant 0 : i32
    return %c0_i32, %c0_i32_0 : i32, i32
  }
  func.func @transform_10(%arg0: i32) -> (i32, i32) {
    %c0_i32 = arith.constant 0 : i32
    %c0_i32_0 = arith.constant 0 : i32
    %c0_i32_1 = arith.constant 0 : i32
    return %c0_i32, %c0_i32_0 : i32, i32
  }
  func.func @transform_11(%arg0: i32) -> (i32, i32) {
    %c0_i32 = arith.constant 0 : i32
    %c0_i32_0 = arith.constant 0 : i32
    %c0_i32_1 = arith.constant 0 : i32
    return %c0_i32, %c0_i32_0 : i32, i32
  }
  func.func @transform_12(%arg0: i32) -> (i32, i32) {
    %c0_i32 = arith.constant 0 : i32
    %c0_i32_0 = arith.constant 0 : i32
    %c0_i32_1 = arith.constant 0 : i32
    return %c0_i32, %c0_i32_0 : i32, i32
  }
  func.func @transform_13(%arg0: i32) -> (i32, i32) {
    %c0_i32 = arith.constant 0 : i32
    %c0_i32_0 = arith.constant 0 : i32
    return %arg0, %c0_i32 : i32, i32
  }
}

</mosaic_0001>

<llo_original>
// kernel: tpu_custom_call.1
$region0: #{tpu_custom_call.1}
  #allocation0 [shape = 'u32[]', space=smem, size = 0x4, offset = 0x4, fixed_abs, tag = 'smem constant byte address 0x4 - core index']
  #allocation1 [shape = 'u32[72,128]{1,0:T(1,128)}', space=vmem, size = 0x9000, scoped, tag = 'internal scratch']
  %s0 = inlined_call_operand.vmem [shape: f32[256,64], index: 0, kind: input, shape index: {}]
  %s1 = inlined_call_operand.vmem [shape: f32[64,32], index: 1, kind: input, shape index: {}]
  %s2 = inlined_call_operand.vmem [shape: f32[1,32], index: 2, kind: input, shape index: {}]
  %s3 = inlined_call_operand.vmem [shape: f32[32,16], index: 3, kind: input, shape index: {}]
  %s4 = inlined_call_operand.vmem [shape: f32[1,16], index: 4, kind: input, shape index: {}]
  %s5 = inlined_call_operand.vmem [shape: f32[16,8], index: 5, kind: input, shape index: {}]
  %s6 = inlined_call_operand.vmem [shape: f32[1,8], index: 6, kind: input, shape index: {}]
  %s7 = inlined_call_operand.vmem [shape: f32[8,16], index: 7, kind: input, shape index: {}]
  %s8 = inlined_call_operand.vmem [shape: f32[1,16], index: 8, kind: input, shape index: {}]
  %s9 = inlined_call_operand.vmem [shape: f32[16,32], index: 9, kind: input, shape index: {}]
  %s10 = inlined_call_operand.vmem [shape: f32[1,32], index: 10, kind: input, shape index: {}]
  %s11 = inlined_call_operand.vmem [shape: f32[32,64], index: 11, kind: input, shape index: {}]
  %s12 = inlined_call_operand.vmem [shape: f32[1,64], index: 12, kind: input, shape index: {}]
  %s13 = inlined_call_operand.vmem [shape: f32[256,64], index: 13, kind: output, shape index: {}]
  %s14 = sld [smem:[#allocation0]]
  $region85: #{tpu_custom_call.1} parent=0
    _
  %s16 = ssub.s32 1, %s14
  %s17 = scalar_select 0, %s16, %s14
  loop: start=0, step=1, limit=4
  $region2: #{tpu_custom_call.1} parent=0 // loop_pre_header
    _
  $region3: #{tpu_custom_call.1} parent=0 // loop_header
    %s19 = sphi 0, %s23
    %p20 = scmp.ge.s32.totalorder %s19, 4
    %s29 = sphi 0, %s31
    %s32 = sphi 0, %s29
    %s33 = sphi 0, %s32
    %s49 = sphi 0, %s33
    %s53 = sphi 0, %s53
    %s55 = sphi 0, %s53
    %s56 = sphi 0, %s55
    %s70 = sphi 0, %s56
    %s74 = sphi 0, %s74
    %s76 = sphi 0, %s74
    %s77 = sphi 0, %s76
    %s91 = sphi 0, %s77
    %s95 = sphi 0, %s95
    %s97 = sphi 0, %s95
    %s98 = sphi 0, %s97
    %s112 = sphi 0, %s98
    %s116 = sphi 0, %s116
    %s118 = sphi 0, %s116
    %s119 = sphi 0, %s118
    %s133 = sphi 0, %s119
    %s137 = sphi 0, %s137
    %s139 = sphi 0, %s137
    %s140 = sphi 0, %s139
    %s154 = sphi 0, %s140
    %s158 = sphi 0, %s158
    %s160 = sphi 0, %s158
    %s161 = sphi 0, %s160
    %s175 = sphi 0, %s161
    %s179 = sphi 0, %s179
    %s181 = sphi 0, %s179
    %s182 = sphi 0, %s181
    %s196 = sphi 0, %s182
    %s200 = sphi 0, %s200
    %s202 = sphi 0, %s200
    %s203 = sphi 0, %s202
    %s217 = sphi 0, %s203
    %s221 = sphi 0, %s221
    %s223 = sphi 0, %s221
    %s224 = sphi 0, %s223
    %s238 = sphi 0, %s224
    %s242 = sphi 0, %s242
    %s244 = sphi 0, %s242
    %s245 = sphi 0, %s244
    %s259 = sphi 0, %s245
    %s263 = sphi 0, %s263
    %s265 = sphi 0, %s263
    %s266 = sphi 0, %s265
    %s280 = sphi 0, %s266
    %s284 = sphi 0, %s284
    %s286 = sphi 0, %s284
    %s287 = sphi 0, %s286
    %s301 = sphi 0, %s287
    %s307 = sphi 0, %s309
    %s310 = sphi 0, %s307
    %s311 = sphi 0, %s310
    %s327 = sphi 0, %s311
  $region4: #{tpu_custom_call.1} parent=0 // loop_header_branch
    %22 = sbr.rel (%p20) target = $region8
  $region5: #{tpu_custom_call.1} parent=0 // loop_body
    %s24 = ssub.s32 %s19, 1
    %s25 = ssub.s32 %s19, 2
    %s26 = sadd.s32 %s19, 1
    %s27 = ssub.s32 %s19, %s26
    %p28 = scmp.eq.s32.totalorder %s27, 0
    %s30 = sadd.s32 %s29, 1
    %s31 = scalar_select %p28, %s29, %s30
    %p34 = pneg %p28
    %p35 = scmp.eq.s32.totalorder %s19, 1
    %p36 = por %p34, %p35
    %p37 = scmp.ne.s32.totalorder %s29, %s32
    %p38 = scmp.eq.s32.totalorder %s19, 0
    %p39 = por %p37, %p38
    %p40 = scmp.ne.s32.totalorder %s29, %s32
    %p41 = scmp.eq.s32.totalorder %s24, 1
    %p42 = por %p40, %p41
    %p43 = scmp.ne.s32.totalorder %s32, %s33
    %p44 = scmp.eq.s32.totalorder %s24, 0
    %p45 = por %p43, %p44
    %p46 = scmp.ne.s32.totalorder %s32, %s33
    %p47 = scmp.eq.s32.totalorder %s25, 1
    %p48 = por %p46, %p47
    %p50 = scmp.ne.s32.totalorder %s33, %s49
    %p51 = scmp.eq.s32.totalorder %s25, 0
    %p52 = por %p50, %p51
    %s54 = sadd.s32 %s53, 1
    %p57 = scmp.eq.s32.totalorder %s19, 1
    %p58 = scmp.ne.s32.totalorder %s53, %s55
    %p59 = scmp.eq.s32.totalorder %s19, 0
    %p60 = por %p58, %p59
    %p61 = scmp.ne.s32.totalorder %s53, %s55
    %p62 = scmp.eq.s32.totalorder %s24, 1
    %p63 = por %p61, %p62
    %p64 = scmp.ne.s32.totalorder %s55, %s56
    %p65 = scmp.eq.s32.totalorder %s24, 0
    %p66 = por %p64, %p65
    %p67 = scmp.ne.s32.totalorder %s55, %s56
    %p68 = scmp.eq.s32.totalorder %s25, 1
    %p69 = por %p67, %p68
    %p71 = scmp.ne.s32.totalorder %s56, %s70
    %p72 = scmp.eq.s32.totalorder %s25, 0
    %p73 = por %p71, %p72
    %s75 = sadd.s32 %s74, 1
    %p78 = scmp.eq.s32.totalorder %s19, 1
    %p79 = scmp.ne.s32.totalorder %s74, %s76
    %p80 = scmp.eq.s32.totalorder %s19, 0
    %p81 = por %p79, %p80
    %p82 = scmp.ne.s32.totalorder %s74, %s76
    %p83 = scmp.eq.s32.totalorder %s24, 1
    %p84 = por %p82, %p83
    %p85 = scmp.ne.s32.totalorder %s76, %s77
    %p86 = scmp.eq.s32.totalorder %s24, 0
    %p87 = por %p85, %p86
    %p88 = scmp.ne.s32.totalorder %s76, %s77
    %p89 = scmp.eq.s32.totalorder %s25, 1
    %p90 = por %p88, %p89
    %p92 = scmp.ne.s32.totalorder %s77, %s91
    %p93 = scmp.eq.s32.totalorder %s25, 0
    %p94 = por %p92, %p93
    %s96 = sadd.s32 %s95, 1
    %p99 = scmp.eq.s32.totalorder %s19, 1
    %p100 = scmp.ne.s32.totalorder %s95, %s97
    %p101 = scmp.eq.s32.totalorder %s19, 0
    %p102 = por %p100, %p101
    %p103 = scmp.ne.s32.totalorder %s95, %s97
    %p104 = scmp.eq.s32.totalorder %s24, 1
    %p105 = por %p103, %p104
    %p106 = scmp.ne.s32.totalorder %s97, %s98
    %p107 = scmp.eq.s32.totalorder %s24, 0
    %p108 = por %p106, %p107
    %p109 = scmp.ne.s32.totalorder %s97, %s98
    %p110 = scmp.eq.s32.totalorder %s25, 1
    %p111 = por %p109, %p110
    %p113 = scmp.ne.s32.totalorder %s98, %s112
    %p114 = scmp.eq.s32.totalorder %s25, 0
    %p115 = por %p113, %p114
    %s117 = sadd.s32 %s116, 1
    %p120 = scmp.eq.s32.totalorder %s19, 1
    %p121 = scmp.ne.s32.totalorder %s116, %s118
    %p122 = scmp.eq.s32.totalorder %s19, 0
    %p123 = por %p121, %p122
    %p124 = scmp.ne.s32.totalorder %s116, %s118
    %p125 = scmp.eq.s32.totalorder %s24, 1
    %p126 = por %p124, %p125
    %p127 = scmp.ne.s32.totalorder %s118, %s119
    %p128 = scmp.eq.s32.totalorder %s24, 0
    %p129 = por %p127, %p128
    %p130 = scmp.ne.s32.totalorder %s118, %s119
    %p131 = scmp.eq.s32.totalorder %s25, 1
    %p132 = por %p130, %p131
    %p134 = scmp.ne.s32.totalorder %s119, %s133
    %p135 = scmp.eq.s32.totalorder %s25, 0
    %p136 = por %p134, %p135
    %s138 = sadd.s32 %s137, 1
    %p141 = scmp.eq.s32.totalorder %s19, 1
    %p142 = scmp.ne.s32.totalorder %s137, %s139
    %p143 = scmp.eq.s32.totalorder %s19, 0
    %p144 = por %p142, %p143
    %p145 = scmp.ne.s32.totalorder %s137, %s139
    %p146 = scmp.eq.s32.totalorder %s24, 1
    %p147 = por %p145, %p146
    %p148 = scmp.ne.s32.totalorder %s139, %s140
    %p149 = scmp.eq.s32.totalorder %s24, 0
    %p150 = por %p148, %p149
    %p151 = scmp.ne.s32.totalorder %s139, %s140
    %p152 = scmp.eq.s32.totalorder %s25, 1
    %p153 = por %p151, %p152
    %p155 = scmp.ne.s32.totalorder %s140, %s154
    %p156 = scmp.eq.s32.totalorder %s25, 0
    %p157 = por %p155, %p156
    %s159 = sadd.s32 %s158, 1
    %p162 = scmp.eq.s32.totalorder %s19, 1
    %p163 = scmp.ne.s32.totalorder %s158, %s160
    %p164 = scmp.eq.s32.totalorder %s19, 0
    %p165 = por %p163, %p164
    %p166 = scmp.ne.s32.totalorder %s158, %s160
    %p167 = scmp.eq.s32.totalorder %s24, 1
    %p168 = por %p166, %p167
    %p169 = scmp.ne.s32.totalorder %s160, %s161
    %p170 = scmp.eq.s32.totalorder %s24, 0
    %p171 = por %p169, %p170
    %p172 = scmp.ne.s32.totalorder %s160, %s161
    %p173 = scmp.eq.s32.totalorder %s25, 1
    %p174 = por %p172, %p173
    %p176 = scmp.ne.s32.totalorder %s161, %s175
    %p177 = scmp.eq.s32.totalorder %s25, 0
    %p178 = por %p176, %p177
    %s180 = sadd.s32 %s179, 1
    %p183 = scmp.eq.s32.totalorder %s19, 1
    %p184 = scmp.ne.s32.totalorder %s179, %s181
    %p185 = scmp.eq.s32.totalorder %s19, 0
    %p186 = por %p184, %p185
    %p187 = scmp.ne.s32.totalorder %s179, %s181
    %p188 = scmp.eq.s32.totalorder %s24, 1
    %p189 = por %p187, %p188
    %p190 = scmp.ne.s32.totalorder %s181, %s182
    %p191 = scmp.eq.s32.totalorder %s24, 0
    %p192 = por %p190, %p191
    %p193 = scmp.ne.s32.totalorder %s181, %s182
    %p194 = scmp.eq.s32.totalorder %s25, 1
    %p195 = por %p193, %p194
    %p197 = scmp.ne.s32.totalorder %s182, %s196
    %p198 = scmp.eq.s32.totalorder %s25, 0
    %p199 = por %p197, %p198
    %s201 = sadd.s32 %s200, 1
    %p204 = scmp.eq.s32.totalorder %s19, 1
    %p205 = scmp.ne.s32.totalorder %s200, %s202
    %p206 = scmp.eq.s32.totalorder %s19, 0
    %p207 = por %p205, %p206
    %p208 = scmp.ne.s32.totalorder %s200, %s202
    %p209 = scmp.eq.s32.totalorder %s24, 1
    %p210 = por %p208, %p209
    %p211 = scmp.ne.s32.totalorder %s202, %s203
    %p212 = scmp.eq.s32.totalorder %s24, 0
    %p213 = por %p211, %p212
    %p214 = scmp.ne.s32.totalorder %s202, %s203
    %p215 = scmp.eq.s32.totalorder %s25, 1
    %p216 = por %p214, %p215
    %p218 = scmp.ne.s32.totalorder %s203, %s217
    %p219 = scmp.eq.s32.totalorder %s25, 0
    %p220 = por %p218, %p219
    %s222 = sadd.s32 %s221, 1
    %p225 = scmp.eq.s32.totalorder %s19, 1
    %p226 = scmp.ne.s32.totalorder %s221, %s223
    %p227 = scmp.eq.s32.totalorder %s19, 0
    %p228 = por %p226, %p227
    %p229 = scmp.ne.s32.totalorder %s221, %s223
    %p230 = scmp.eq.s32.totalorder %s24, 1
    %p231 = por %p229, %p230
    %p232 = scmp.ne.s32.totalorder %s223, %s224
    %p233 = scmp.eq.s32.totalorder %s24, 0
    %p234 = por %p232, %p233
    %p235 = scmp.ne.s32.totalorder %s223, %s224
    %p236 = scmp.eq.s32.totalorder %s25, 1
    %p237 = por %p235, %p236
    %p239 = scmp.ne.s32.totalorder %s224, %s238
    %p240 = scmp.eq.s32.totalorder %s25, 0
    %p241 = por %p239, %p240
    %s243 = sadd.s32 %s242, 1
    %p246 = scmp.eq.s32.totalorder %s19, 1
    %p247 = scmp.ne.s32.totalorder %s242, %s244
    %p248 = scmp.eq.s32.totalorder %s19, 0
    %p249 = por %p247, %p248
    %p250 = scmp.ne.s32.totalorder %s242, %s244
    %p251 = scmp.eq.s32.totalorder %s24, 1
    %p252 = por %p250, %p251
    %p253 = scmp.ne.s32.totalorder %s244, %s245
    %p254 = scmp.eq.s32.totalorder %s24, 0
    %p255 = por %p253, %p254
    %p256 = scmp.ne.s32.totalorder %s244, %s245
    %p257 = scmp.eq.s32.totalorder %s25, 1
    %p258 = por %p256, %p257
    %p260 = scmp.ne.s32.totalorder %s245, %s259
    %p261 = scmp.eq.s32.totalorder %s25, 0
    %p262 = por %p260, %p261
    %s264 = sadd.s32 %s263, 1
    %p267 = scmp.eq.s32.totalorder %s19, 1
    %p268 = scmp.ne.s32.totalorder %s263, %s265
    %p269 = scmp.eq.s32.totalorder %s19, 0
    %p270 = por %p268, %p269
    %p271 = scmp.ne.s32.totalorder %s263, %s265
    %p272 = scmp.eq.s32.totalorder %s24, 1
    %p273 = por %p271, %p272
    %p274 = scmp.ne.s32.totalorder %s265, %s266
    %p275 = scmp.eq.s32.totalorder %s24, 0
    %p276 = por %p274, %p275
    %p277 = scmp.ne.s32.totalorder %s265, %s266
    %p278 = scmp.eq.s32.totalorder %s25, 1
    %p279 = por %p277, %p278
    %p281 = scmp.ne.s32.totalorder %s266, %s280
    %p282 = scmp.eq.s32.totalorder %s25, 0
    %p283 = por %p281, %p282
    %s285 = sadd.s32 %s284, 1
    %p288 = scmp.eq.s32.totalorder %s19, 1
    %p289 = scmp.ne.s32.totalorder %s284, %s286
    %p290 = scmp.eq.s32.totalorder %s19, 0
    %p291 = por %p289, %p290
    %p292 = scmp.ne.s32.totalorder %s284, %s286
    %p293 = scmp.eq.s32.totalorder %s24, 1
    %p294 = por %p292, %p293
    %p295 = scmp.ne.s32.totalorder %s286, %s287
    %p296 = scmp.eq.s32.totalorder %s24, 0
    %p297 = por %p295, %p296
    %p298 = scmp.ne.s32.totalorder %s286, %s287
    %p299 = scmp.eq.s32.totalorder %s25, 1
    %p300 = por %p298, %p299
    %p302 = scmp.ne.s32.totalorder %s287, %s301
    %p303 = scmp.eq.s32.totalorder %s25, 0
    %p304 = por %p302, %p303
    %s305 = ssub.s32 %s19, %s26
    %p306 = scmp.eq.s32.totalorder %s305, 0
    %s308 = sadd.s32 %s307, 1
    %s309 = scalar_select %p306, %s307, %s308
    %p312 = pneg %p306
    %p313 = scmp.eq.s32.totalorder %s19, 1
    %p314 = por %p312, %p313
    %p315 = scmp.ne.s32.totalorder %s307, %s310
    %p316 = scmp.eq.s32.totalorder %s19, 0
    %p317 = por %p315, %p316
    %p318 = scmp.ne.s32.totalorder %s307, %s310
    %p319 = scmp.eq.s32.totalorder %s24, 1
    %p320 = por %p318, %p319
    %p321 = scmp.ne.s32.totalorder %s310, %s311
    %p322 = scmp.eq.s32.totalorder %s24, 0
    %p323 = por %p321, %p322
    %p324 = scmp.ne.s32.totalorder %s310, %s311
    %p325 = scmp.eq.s32.totalorder %s25, 1
    %p326 = por %p324, %p325
    %p328 = scmp.ne.s32.totalorder %s311, %s327
    %p329 = scmp.eq.s32.totalorder %s25, 0
    %p330 = por %p328, %p329
    %p331 = scmp.le.s32.totalorder 1, %s19
    %p332 = scmp.lt.s32.totalorder %s19, 3
    %p333 = pnand %p331, %p332
    %p334 = pneg %p333
    // Predicated region
    $region9: #{tpu_custom_call.1} parent=5 // pred_check
      _
    $region10: #{tpu_custom_call.1} parent=5 // pred_check_branch
      %336 = sbr.rel (%p333) target = $region12
    $region11: #{tpu_custom_call.1} parent=5 // pred_region
      %s337 = ssub.s32 %s19, 1
      // Predicated region
      $region13: #{tpu_custom_call.1} parent=11 // pred_check
        %p338 = pneg %p66
      $region14: #{tpu_custom_call.1} parent=11 // pred_check_branch
        %340 = sbr.rel (%p338) target = $region16
      $region15: #{tpu_custom_call.1} parent=11 // pred_region
        _
      $region16: #{tpu_custom_call.1} parent=11 // pred_fallthru
        _
      // Predicated region
      $region17: #{tpu_custom_call.1} parent=11 // pred_check
        %p341 = pneg %p87
      $region18: #{tpu_custom_call.1} parent=11 // pred_check_branch
        %343 = sbr.rel (%p341) target = $region20
      $region19: #{tpu_custom_call.1} parent=11 // pred_region
        _
      $region20: #{tpu_custom_call.1} parent=11 // pred_fallthru
        _
      // Predicated region
      $region21: #{tpu_custom_call.1} parent=11 // pred_check
        %p344 = pneg %p108
      $region22: #{tpu_custom_call.1} parent=11 // pred_check_branch
        %346 = sbr.rel (%p344) target = $region24
      $region23: #{tpu_custom_call.1} parent=11 // pred_region
        _
      $region24: #{tpu_custom_call.1} parent=11 // pred_fallthru
        _
      // Predicated region
      $region25: #{tpu_custom_call.1} parent=11 // pred_check
        %p347 = pneg %p129
      $region26: #{tpu_custom_call.1} parent=11 // pred_check_branch
        %349 = sbr.rel (%p347) target = $region28
      $region27: #{tpu_custom_call.1} parent=11 // pred_region
        _
      $region28: #{tpu_custom_call.1} parent=11 // pred_fallthru
        _
      // Predicated region
      $region29: #{tpu_custom_call.1} parent=11 // pred_check
        %p350 = pneg %p150
      $region30: #{tpu_custom_call.1} parent=11 // pred_check_branch
        %352 = sbr.rel (%p350) target = $region32
      $region31: #{tpu_custom_call.1} parent=11 // pred_region
        _
      $region32: #{tpu_custom_call.1} parent=11 // pred_fallthru
        _
      // Predicated region
      $region33: #{tpu_custom_call.1} parent=11 // pred_check
        %p353 = pneg %p171
      $region34: #{tpu_custom_call.1} parent=11 // pred_check_branch
        %355 = sbr.rel (%p353) target = $region36
      $region35: #{tpu_custom_call.1} parent=11 // pred_region
        _
      $region36: #{tpu_custom_call.1} parent=11 // pred_fallthru
        _
      // Predicated region
      $region37: #{tpu_custom_call.1} parent=11 // pred_check
        %p356 = pneg %p192
      $region38: #{tpu_custom_call.1} parent=11 // pred_check_branch
        %358 = sbr.rel (%p356) target = $region40
      $region39: #{tpu_custom_call.1} parent=11 // pred_region
        _
      $region40: #{tpu_custom_call.1} parent=11 // pred_fallthru
        _
      // Predicated region
      $region41: #{tpu_custom_call.1} parent=11 // pred_check
        %p359 = pneg %p213
      $region42: #{tpu_custom_call.1} parent=11 // pred_check_branch
        %361 = sbr.rel (%p359) target = $region44
      $region43: #{tpu_custom_call.1} parent=11 // pred_region
        _
      $region44: #{tpu_custom_call.1} parent=11 // pred_fallthru
        _
      // Predicated region
      $region45: #{tpu_custom_call.1} parent=11 // pred_check
        %p362 = pneg %p234
      $region46: #{tpu_custom_call.1} parent=11 // pred_check_branch
        %364 = sbr.rel (%p362) target = $region48
      $region47: #{tpu_custom_call.1} parent=11 // pred_region
        _
      $region48: #{tpu_custom_call.1} parent=11 // pred_fallthru
        _
      // Predicated region
      $region49: #{tpu_custom_call.1} parent=11 // pred_check
        %p365 = pneg %p255
      $region50: #{tpu_custom_call.1} parent=11 // pred_check_branch
        %367 = sbr.rel (%p365) target = $region52
      $region51: #{tpu_custom_call.1} parent=11 // pred_region
        _
      $region52: #{tpu_custom_call.1} parent=11 // pred_fallthru
        _
      // Predicated region
      $region53: #{tpu_custom_call.1} parent=11 // pred_check
        %p368 = pneg %p276
      $region54: #{tpu_custom_call.1} parent=11 // pred_check_branch
        %370 = sbr.rel (%p368) target = $region56
      $region55: #{tpu_custom_call.1} parent=11 // pred_region
        _
      $region56: #{tpu_custom_call.1} parent=11 // pred_fallthru
        _
      // Predicated region
      $region57: #{tpu_custom_call.1} parent=11 // pred_check
        %p371 = pneg %p297
      $region58: #{tpu_custom_call.1} parent=11 // pred_check_branch
        %373 = sbr.rel (%p371) target = $region60
      $region59: #{tpu_custom_call.1} parent=11 // pred_region
        _
      $region60: #{tpu_custom_call.1} parent=11 // pred_fallthru
        _
    $region12: #{tpu_custom_call.1} parent=5 // pred_fallthru
      _
    %p374 = scmp.lt.s32.totalorder %s19, 2
    // Predicated region
    $region61: #{tpu_custom_call.1} parent=5 // pred_check
      %p375 = pneg %p374
    $region62: #{tpu_custom_call.1} parent=5 // pred_check_branch
      %377 = sbr.rel (%p375) target = $region64
    $region63: #{tpu_custom_call.1} parent=5 // pred_region
      // Predicated region
      $region65: #{tpu_custom_call.1} parent=63 // pred_check
        %p378 = pneg %p39
      $region66: #{tpu_custom_call.1} parent=63 // pred_check_branch
        %380 = sbr.rel (%p378) target = $region68
      $region67: #{tpu_custom_call.1} parent=63 // pred_region
        %s381 = smul.u32 16, %s19
        %p382 = scmp.lt.s32.totalorder %s381, 31
        %s383 = scalar_select %p382, %s381, 31
        %s384 = smul.addr %s383, 8
        %s385 = scalar_lea.vmem %s0, %s384
        %s386 = smul.u32 16, %s19
      $region68: #{tpu_custom_call.1} parent=63 // pred_fallthru
        _
    $region64: #{tpu_custom_call.1} parent=5 // pred_fallthru
      _
    %p387 = scmp.le.s32.totalorder 1, %s19
    %p388 = scmp.lt.s32.totalorder %s19, 3
    %p389 = pnand %p387, %p388
    %p390 = pneg %p389
    // Predicated region
    $region69: #{tpu_custom_call.1} parent=5 // pred_check
      _
    $region70: #{tpu_custom_call.1} parent=5 // pred_check_branch
      %392 = sbr.rel (%p389) target = $region72
    $region71: #{tpu_custom_call.1} parent=5 // pred_region
      %s393 = ssub.s32 %s19, 1
      %s394 = smul.u32 16, %s24
      %p395 = scmp.lt.s32.totalorder %s394, 31
      %s396 = scalar_select %p395, %s394, 31
      %s397 = smul.addr %s396, 8
      %s398 = scalar_lea.vmem %s0, %s397
      %p399 = pneg %p45
      %p400 = pneg %p42
      %p401 = pneg %p66
      %p402 = pneg %p63
      %p403 = pneg %p87
      %p404 = pneg %p84
      %p405 = pneg %p108
      %p406 = pneg %p105
      %p407 = pneg %p129
      %p408 = pneg %p126
      %p409 = pneg %p150
      %p410 = pneg %p147
      %p411 = pneg %p171
      %p412 = pneg %p168
      %p413 = pneg %p192
      %p414 = pneg %p189
      %p415 = pneg %p213
      %p416 = pneg %p210
      %p417 = pneg %p234
      %p418 = pneg %p231
      %p419 = pneg %p255
      %p420 = pneg %p252
      %p421 = pneg %p276
      %p422 = pneg %p273
      %p423 = pneg %p297
      %p424 = pneg %p294
      %p425 = pneg %p323
      %p426 = pneg %p320
      %s427 = smul.u32 16, %s24
      %p428 = scmp.lt.s32.totalorder %s427, 31
      %s429 = scalar_select %p428, %s427, 31
      %s430 = smul.addr %s429, 8
      %s431 = scalar_lea.vmem %s13, %s430
      %s432 = smul.u32 16, %s24
      %p433 = scmp.lt.s32.totalorder %s432, 31
      %s434 = scalar_select %p433, %s432, 31
      %s435 = smul.addr %s434, 8
      %s436 = scalar_lea.vmem %s0, %s435
      %s437 = smul.u32 16, %s24
      %s438 = smul.u32 16, %s24
      %p439 = scmp.lt.s32.totalorder %s438, 31
      %s440 = scalar_select %p439, %s438, 31
      %s441 = smul.addr %s440, 8
      %s442 = scalar_lea.vmem %s13, %s441
      %s443 = smul.u32 16, %s24
      %v444 = vld [vmem:[%s436] sm:$0xff]
      %v445 = vld [vmem:[%s436 + $0x8] sm:$0xff]
      %v446 = vld [vmem:[%s436 + $0x10] sm:$0xff]
      %v447 = vld [vmem:[%s436 + $0x18] sm:$0xff]
      %v448 = vld [vmem:[%s436 + $0x20] sm:$0xff]
      %v449 = vld [vmem:[%s436 + $0x28] sm:$0xff]
      %v450 = vld [vmem:[%s436 + $0x30] sm:$0xff]
      %v451 = vld [vmem:[%s436 + $0x38] sm:$0xff]
      %v452 = vld [vmem:[%s436 + $0x40] sm:$0xff]
      %v453 = vld [vmem:[%s436 + $0x48] sm:$0xff]
      %v454 = vld [vmem:[%s436 + $0x50] sm:$0xff]
      %v455 = vld [vmem:[%s436 + $0x58] sm:$0xff]
      %v456 = vld [vmem:[%s436 + $0x60] sm:$0xff]
      %v457 = vld [vmem:[%s436 + $0x68] sm:$0xff]
      %v458 = vld [vmem:[%s436 + $0x70] sm:$0xff]
      %v459 = vld [vmem:[%s436 + $0x78] sm:$0xff]
      %v460 = vld [vmem:[%s1] sm:$0xff]
      %v461 = vld [vmem:[%s1 + $0x8] sm:$0xff]
      %v462 = vld [vmem:[%s1 + $0x10] sm:$0xff]
      %v463 = vld [vmem:[%s1 + $0x18] sm:$0xff]
      %v464 = vld [vmem:[%s1 + $0x20] sm:$0xff]
      %v465 = vld [vmem:[%s1 + $0x28] sm:$0xff]
      %v466 = vld [vmem:[%s1 + $0x30] sm:$0xff]
      %v467 = vld [vmem:[%s1 + $0x38] sm:$0xff]
      %v468 = vld [vmem:[%s2] sm:$0x1]
      %v470 = vperm.slane %v468, 0
      %vm472 = vcmask 523264
      %v474 = vsel %vm472, %v444, 0
      %v477 = vsel %vm472, %v445, 0
      %v480 = vsel %vm472, %v446, 0
      %v483 = vsel %vm472, %v447, 0
      %v486 = vsel %vm472, %v448, 0
      %v489 = vsel %vm472, %v449, 0
      %v492 = vsel %vm472, %v450, 0
      %v495 = vsel %vm472, %v451, 0
      %v498 = vsel %vm472, %v452, 0
      %v501 = vsel %vm472, %v453, 0
      %v504 = vsel %vm472, %v454, 0
      %v507 = vsel %vm472, %v455, 0
      %v510 = vsel %vm472, %v456, 0
      %v513 = vsel %vm472, %v457, 0
      %v516 = vsel %vm472, %v458, 0
      %v519 = vsel %vm472, %v459, 0
      %521 = vmatpush.msra.mxu0 0.0
      %522 = vmatpush.msra.mxu0 0.0
      %523 = vmatpush.msra.mxu0 0.0
      %524 = vmatpush.msra.mxu0 0.0
      %525 = vmatpush.msra.mxu0 0.0
      %526 = vmatpush.msra.mxu0 0.0
      %527 = vmatpush.msra.mxu0 0.0
      %528 = vmatpush.msra.mxu0 0.0
      %529 = vmatpush.msra.mxu0 %v467
      %530 = vmatpush.msra.mxu0 %v466
      %531 = vmatpush.msra.mxu0 %v465
      %532 = vmatpush.msra.mxu0 %v464
      %533 = vmatpush.msra.mxu0 %v463
      %534 = vmatpush.msra.mxu0 %v462
      %535 = vmatpush.msra.mxu0 %v461
      %536 = vmatpush.msra.mxu0 %v460
      %537 = vmatmul.f32.gmra.mxu0 %v474
      %v538 = vpop.f32.mrf.mxu0
      %v539 = vadd.f32 %v470, %v538
      %540 = vmatmul.f32.gmra.mxu0 %v477
      %v541 = vpop.f32.mrf.mxu0
      %v542 = vadd.f32 %v470, %v541
      %543 = vmatmul.f32.gmra.mxu0 %v480
      %v544 = vpop.f32.mrf.mxu0
      %v545 = vadd.f32 %v470, %v544
      %546 = vmatmul.f32.gmra.mxu0 %v483
      %v547 = vpop.f32.mrf.mxu0
      %v548 = vadd.f32 %v470, %v547
      %549 = vmatmul.f32.gmra.mxu0 %v486
      %v550 = vpop.f32.mrf.mxu0
      %v551 = vadd.f32 %v470, %v550
      %552 = vmatmul.f32.gmra.mxu0 %v489
      %v553 = vpop.f32.mrf.mxu0
      %v554 = vadd.f32 %v470, %v553
      %555 = vmatmul.f32.gmra.mxu0 %v492
      %v556 = vpop.f32.mrf.mxu0
      %v557 = vadd.f32 %v470, %v556
      %558 = vmatmul.f32.gmra.mxu0 %v495
      %v559 = vpop.f32.mrf.mxu0
      %v560 = vadd.f32 %v470, %v559
      %561 = vmatmul.f32.gmra.mxu0 %v498
      %v562 = vpop.f32.mrf.mxu0
      %v563 = vadd.f32 %v470, %v562
      %564 = vmatmul.f32.gmra.mxu0 %v501
      %v565 = vpop.f32.mrf.mxu0
      %v566 = vadd.f32 %v470, %v565
      %567 = vmatmul.f32.gmra.mxu0 %v504
      %v568 = vpop.f32.mrf.mxu0
      %v569 = vadd.f32 %v470, %v568
      %570 = vmatmul.f32.gmra.mxu0 %v507
      %v571 = vpop.f32.mrf.mxu0
      %v572 = vadd.f32 %v470, %v571
      %573 = vmatmul.f32.gmra.mxu0 %v510
      %v574 = vpop.f32.mrf.mxu0
      %v575 = vadd.f32 %v470, %v574
      %576 = vmatmul.f32.gmra.mxu0 %v513
      %v577 = vpop.f32.mrf.mxu0
      %v578 = vadd.f32 %v470, %v577
      %579 = vmatmul.f32.gmra.mxu0 %v516
      %v580 = vpop.f32.mrf.mxu0
      %v581 = vadd.f32 %v470, %v580
      %582 = vmatmul.f32.gmra.mxu0 %v519
      %v583 = vpop.f32.mrf.mxu0
      %v584 = vadd.f32 %v470, %v583
      %585 = vdwg.mxu0
      %v586 = vmax.f32 %v539, 0.0
      %v587 = vmax.f32 %v542, 0.0
      %v588 = vmax.f32 %v545, 0.0
      %v589 = vmax.f32 %v548, 0.0
      %v590 = vmax.f32 %v551, 0.0
      %v591 = vmax.f32 %v554, 0.0
      %v592 = vmax.f32 %v557, 0.0
      %v593 = vmax.f32 %v560, 0.0
      %v594 = vmax.f32 %v563, 0.0
      %v595 = vmax.f32 %v566, 0.0
      %v596 = vmax.f32 %v569, 0.0
      %v597 = vmax.f32 %v572, 0.0
      %v598 = vmax.f32 %v575, 0.0
      %v599 = vmax.f32 %v578, 0.0
      %v600 = vmax.f32 %v581, 0.0
      %v601 = vmax.f32 %v584, 0.0
      %v602 = vld [vmem:[%s3] sm:$0xff]
      %v603 = vld [vmem:[%s3 + $0x8] sm:$0xff]
      %v604 = vld [vmem:[%s3 + $0x10] sm:$0xff]
      %v605 = vld [vmem:[%s3 + $0x18] sm:$0xff]
      %v606 = vld [vmem:[%s4] sm:$0x1]
      %v608 = vperm.slane %v606, 0
      %vm610 = vcmask 261120
      %v612 = vsel %vm610, %v586, 0
      %v615 = vsel %vm610, %v587, 0
      %v618 = vsel %vm610, %v588, 0
      %v621 = vsel %vm610, %v589, 0
      %v624 = vsel %vm610, %v590, 0
      %v627 = vsel %vm610, %v591, 0
      %v630 = vsel %vm610, %v592, 0
      %v633 = vsel %vm610, %v593, 0
      %v636 = vsel %vm610, %v594, 0
      %v639 = vsel %vm610, %v595, 0
      %v642 = vsel %vm610, %v596, 0
      %v645 = vsel %vm610, %v597, 0
      %v648 = vsel %vm610, %v598, 0
      %v651 = vsel %vm610, %v599, 0
      %v654 = vsel %vm610, %v600, 0
      %v657 = vsel %vm610, %v601, 0
      %659 = vmatpush.msra.mxu0 0.0
      %660 = vmatpush.msra.mxu0 0.0
      %661 = vmatpush.msra.mxu0 0.0
      %662 = vmatpush.msra.mxu0 0.0
      %663 = vmatpush.msra.mxu0 0.0
      %664 = vmatpush.msra.mxu0 0.0
      %665 = vmatpush.msra.mxu0 0.0
      %666 = vmatpush.msra.mxu0 0.0
      %667 = vmatpush.msra.mxu0 0.0
      %668 = vmatpush.msra.mxu0 0.0
      %669 = vmatpush.msra.mxu0 0.0
      %670 = vmatpush.msra.mxu0 0.0
      %671 = vmatpush.msra.mxu0 %v605
      %672 = vmatpush.msra.mxu0 %v604
      %673 = vmatpush.msra.mxu0 %v603
      %674 = vmatpush.msra.mxu0 %v602
      %675 = vmatmul.f32.gmra.mxu0 %v612
      %v676 = vpop.f32.mrf.mxu0
      %v677 = vadd.f32 %v608, %v676
      %678 = vmatmul.f32.gmra.mxu0 %v615
      %v679 = vpop.f32.mrf.mxu0
      %v680 = vadd.f32 %v608, %v679
      %681 = vmatmul.f32.gmra.mxu0 %v618
      %v682 = vpop.f32.mrf.mxu0
      %v683 = vadd.f32 %v608, %v682
      %684 = vmatmul.f32.gmra.mxu0 %v621
      %v685 = vpop.f32.mrf.mxu0
      %v686 = vadd.f32 %v608, %v685
      %687 = vmatmul.f32.gmra.mxu0 %v624
      %v688 = vpop.f32.mrf.mxu0
      %v689 = vadd.f32 %v608, %v688
      %690 = vmatmul.f32.gmra.mxu0 %v627
      %v691 = vpop.f32.mrf.mxu0
      %v692 = vadd.f32 %v608, %v691
      %693 = vmatmul.f32.gmra.mxu0 %v630
      %v694 = vpop.f32.mrf.mxu0
      %v695 = vadd.f32 %v608, %v694
      %696 = vmatmul.f32.gmra.mxu0 %v633
      %v697 = vpop.f32.mrf.mxu0
      %v698 = vadd.f32 %v608, %v697
      %699 = vmatmul.f32.gmra.mxu0 %v636
      %v700 = vpop.f32.mrf.mxu0
      %v701 = vadd.f32 %v608, %v700
      %702 = vmatmul.f32.gmra.mxu0 %v639
      %v703 = vpop.f32.mrf.mxu0
      %v704 = vadd.f32 %v608, %v703
      %705 = vmatmul.f32.gmra.mxu0 %v642
      %v706 = vpop.f32.mrf.mxu0
      %v707 = vadd.f32 %v608, %v706
      %708 = vmatmul.f32.gmra.mxu0 %v645
      %v709 = vpop.f32.mrf.mxu0
      %v710 = vadd.f32 %v608, %v709
      %711 = vmatmul.f32.gmra.mxu0 %v648
      %v712 = vpop.f32.mrf.mxu0
      %v713 = vadd.f32 %v608, %v712
      %714 = vmatmul.f32.gmra.mxu0 %v651
      %v715 = vpop.f32.mrf.mxu0
      %v716 = vadd.f32 %v608, %v715
      %717 = vmatmul.f32.gmra.mxu0 %v654
      %v718 = vpop.f32.mrf.mxu0
      %v719 = vadd.f32 %v608, %v718
      %720 = vmatmul.f32.gmra.mxu0 %v657
      %v721 = vpop.f32.mrf.mxu0
      %v722 = vadd.f32 %v608, %v721
      %723 = vdwg.mxu0
      %v724 = vmax.f32 %v677, 0.0
      %v725 = vmax.f32 %v680, 0.0
      %v726 = vmax.f32 %v683, 0.0
      %v727 = vmax.f32 %v686, 0.0
      %v728 = vmax.f32 %v689, 0.0
      %v729 = vmax.f32 %v692, 0.0
      %v730 = vmax.f32 %v695, 0.0
      %v731 = vmax.f32 %v698, 0.0
      %v732 = vmax.f32 %v701, 0.0
      %v733 = vmax.f32 %v704, 0.0
      %v734 = vmax.f32 %v707, 0.0
      %v735 = vmax.f32 %v710, 0.0
      %v736 = vmax.f32 %v713, 0.0
      %v737 = vmax.f32 %v716, 0.0
      %v738 = vmax.f32 %v719, 0.0
      %v739 = vmax.f32 %v722, 0.0
      %v740 = vld [vmem:[%s5] sm:$0xff]
      %v741 = vld [vmem:[%s5 + $0x8] sm:$0xff]
      %v742 = vld [vmem:[%s6] sm:$0x1]
      %v744 = vperm.slane %v742, 0
      %vm746 = vcmask 130048
      %v748 = vsel %vm746, %v724, 0
      %v751 = vsel %vm746, %v725, 0
      %v754 = vsel %vm746, %v726, 0
      %v757 = vsel %vm746, %v727, 0
      %v760 = vsel %vm746, %v728, 0
      %v763 = vsel %vm746, %v729, 0
      %v766 = vsel %vm746, %v730, 0
      %v769 = vsel %vm746, %v731, 0
      %v772 = vsel %vm746, %v732, 0
      %v775 = vsel %vm746, %v733, 0
      %v778 = vsel %vm746, %v734, 0
      %v781 = vsel %vm746, %v735, 0
      %v784 = vsel %vm746, %v736, 0
      %v787 = vsel %vm746, %v737, 0
      %v790 = vsel %vm746, %v738, 0
      %v793 = vsel %vm746, %v739, 0
      %795 = vmatpush.msra.mxu0 0.0
      %796 = vmatpush.msra.mxu0 0.0
      %797 = vmatpush.msra.mxu0 0.0
      %798 = vmatpush.msra.mxu0 0.0
      %799 = vmatpush.msra.mxu0 0.0
      %800 = vmatpush.msra.mxu0 0.0
      %801 = vmatpush.msra.mxu0 0.0
      %802 = vmatpush.msra.mxu0 0.0
      %803 = vmatpush.msra.mxu0 0.0
      %804 = vmatpush.msra.mxu0 0.0
      %805 = vmatpush.msra.mxu0 0.0
      %806 = vmatpush.msra.mxu0 0.0
      %807 = vmatpush.msra.mxu0 0.0
      %808 = vmatpush.msra.mxu0 0.0
      %809 = vmatpush.msra.mxu0 %v741
      %810 = vmatpush.msra.mxu0 %v740
      %811 = vmatmul.f32.gmra.mxu0 %v748
      %v812 = vpop.f32.mrf.mxu0
      %v813 = vadd.f32 %v744, %v812
      %814 = vmatmul.f32.gmra.mxu0 %v751
      %v815 = vpop.f32.mrf.mxu0
      %v816 = vadd.f32 %v744, %v815
      %817 = vmatmul.f32.gmra.mxu0 %v754
      %v818 = vpop.f32.mrf.mxu0
      %v819 = vadd.f32 %v744, %v818
      %820 = vmatmul.f32.gmra.mxu0 %v757
      %v821 = vpop.f32.mrf.mxu0
      %v822 = vadd.f32 %v744, %v821
      %823 = vmatmul.f32.gmra.mxu0 %v760
      %v824 = vpop.f32.mrf.mxu0
      %v825 = vadd.f32 %v744, %v824
      %826 = vmatmul.f32.gmra.mxu0 %v763
      %v827 = vpop.f32.mrf.mxu0
      %v828 = vadd.f32 %v744, %v827
      %829 = vmatmul.f32.gmra.mxu0 %v766
      %v830 = vpop.f32.mrf.mxu0
      %v831 = vadd.f32 %v744, %v830
      %832 = vmatmul.f32.gmra.mxu0 %v769
      %v833 = vpop.f32.mrf.mxu0
      %v834 = vadd.f32 %v744, %v833
      %835 = vmatmul.f32.gmra.mxu0 %v772
      %v836 = vpop.f32.mrf.mxu0
      %v837 = vadd.f32 %v744, %v836
      %838 = vmatmul.f32.gmra.mxu0 %v775
      %v839 = vpop.f32.mrf.mxu0
      %v840 = vadd.f32 %v744, %v839
      %841 = vmatmul.f32.gmra.mxu0 %v778
      %v842 = vpop.f32.mrf.mxu0
      %v843 = vadd.f32 %v744, %v842
      %844 = vmatmul.f32.gmra.mxu0 %v781
      %v845 = vpop.f32.mrf.mxu0
      %v846 = vadd.f32 %v744, %v845
      %847 = vmatmul.f32.gmra.mxu0 %v784
      %v848 = vpop.f32.mrf.mxu0
      %v849 = vadd.f32 %v744, %v848
      %850 = vmatmul.f32.gmra.mxu0 %v787
      %v851 = vpop.f32.mrf.mxu0
      %v852 = vadd.f32 %v744, %v851
      %853 = vmatmul.f32.gmra.mxu0 %v790
      %v854 = vpop.f32.mrf.mxu0
      %v855 = vadd.f32 %v744, %v854
      %856 = vmatmul.f32.gmra.mxu0 %v793
      %v857 = vpop.f32.mrf.mxu0
      %v858 = vadd.f32 %v744, %v857
      %859 = vdwg.mxu0
      %v860 = vmax.f32 %v813, 0.0
      %v861 = vmax.f32 %v816, 0.0
      %v862 = vmax.f32 %v819, 0.0
      %v863 = vmax.f32 %v822, 0.0
      %v864 = vmax.f32 %v825, 0.0
      %v865 = vmax.f32 %v828, 0.0
      %v866 = vmax.f32 %v831, 0.0
      %v867 = vmax.f32 %v834, 0.0
      %v868 = vmax.f32 %v837, 0.0
      %v869 = vmax.f32 %v840, 0.0
      %v870 = vmax.f32 %v843, 0.0
      %v871 = vmax.f32 %v846, 0.0
      %v872 = vmax.f32 %v849, 0.0
      %v873 = vmax.f32 %v852, 0.0
      %v874 = vmax.f32 %v855, 0.0
      %v875 = vmax.f32 %v858, 0.0
      %v876 = vld [vmem:[%s7] sm:$0xff]
      %v877 = vld [vmem:[%s8] sm:$0x1]
      %v879 = vperm.slane %v877, 0
      %vm881 = vcmask 64512
      %v883 = vsel %vm881, %v860, 0
      %v886 = vsel %vm881, %v861, 0
      %v889 = vsel %vm881, %v862, 0
      %v892 = vsel %vm881, %v863, 0
      %v895 = vsel %vm881, %v864, 0
      %v898 = vsel %vm881, %v865, 0
      %v901 = vsel %vm881, %v866, 0
      %v904 = vsel %vm881, %v867, 0
      %v907 = vsel %vm881, %v868, 0
      %v910 = vsel %vm881, %v869, 0
      %v913 = vsel %vm881, %v870, 0
      %v916 = vsel %vm881, %v871, 0
      %v919 = vsel %vm881, %v872, 0
      %v922 = vsel %vm881, %v873, 0
      %v925 = vsel %vm881, %v874, 0
      %v928 = vsel %vm881, %v875, 0
      %930 = vmatpush.msra.mxu0 0.0
      %931 = vmatpush.msra.mxu0 0.0
      %932 = vmatpush.msra.mxu0 0.0
      %933 = vmatpush.msra.mxu0 0.0
      %934 = vmatpush.msra.mxu0 0.0
      %935 = vmatpush.msra.mxu0 0.0
      %936 = vmatpush.msra.mxu0 0.0
      %937 = vmatpush.msra.mxu0 0.0
      %938 = vmatpush.msra.mxu0 0.0
      %939 = vmatpush.msra.mxu0 0.0
      %940 = vmatpush.msra.mxu0 0.0
      %941 = vmatpush.msra.mxu0 0.0
      %942 = vmatpush.msra.mxu0 0.0
      %943 = vmatpush.msra.mxu0 0.0
      %944 = vmatpush.msra.mxu0 0.0
      %945 = vmatpush.msra.mxu0 %v876
      %946 = vmatmul.f32.gmra.mxu0 %v883
      %v947 = vpop.f32.mrf.mxu0
      %v948 = vadd.f32 %v879, %v947
      %949 = vmatmul.f32.gmra.mxu0 %v886
      %v950 = vpop.f32.mrf.mxu0
      %v951 = vadd.f32 %v879, %v950
      %952 = vmatmul.f32.gmra.mxu0 %v889
      %v953 = vpop.f32.mrf.mxu0
      %v954 = vadd.f32 %v879, %v953
      %955 = vmatmul.f32.gmra.mxu0 %v892
      %v956 = vpop.f32.mrf.mxu0
      %v957 = vadd.f32 %v879, %v956
      %958 = vmatmul.f32.gmra.mxu0 %v895
      %v959 = vpop.f32.mrf.mxu0
      %v960 = vadd.f32 %v879, %v959
      %961 = vmatmul.f32.gmra.mxu0 %v898
      %v962 = vpop.f32.mrf.mxu0
      %v963 = vadd.f32 %v879, %v962
      %964 = vmatmul.f32.gmra.mxu0 %v901
      %v965 = vpop.f32.mrf.mxu0
      %v966 = vadd.f32 %v879, %v965
      %967 = vmatmul.f32.gmra.mxu0 %v904
      %v968 = vpop.f32.mrf.mxu0
      %v969 = vadd.f32 %v879, %v968
      %970 = vmatmul.f32.gmra.mxu0 %v907
      %v971 = vpop.f32.mrf.mxu0
      %v972 = vadd.f32 %v879, %v971
      %973 = vmatmul.f32.gmra.mxu0 %v910
      %v974 = vpop.f32.mrf.mxu0
      %v975 = vadd.f32 %v879, %v974
      %976 = vmatmul.f32.gmra.mxu0 %v913
      %v977 = vpop.f32.mrf.mxu0
      %v978 = vadd.f32 %v879, %v977
      %979 = vmatmul.f32.gmra.mxu0 %v916
      %v980 = vpop.f32.mrf.mxu0
      %v981 = vadd.f32 %v879, %v980
      %982 = vmatmul.f32.gmra.mxu0 %v919
      %v983 = vpop.f32.mrf.mxu0
      %v984 = vadd.f32 %v879, %v983
      %985 = vmatmul.f32.gmra.mxu0 %v922
      %v986 = vpop.f32.mrf.mxu0
      %v987 = vadd.f32 %v879, %v986
      %988 = vmatmul.f32.gmra.mxu0 %v925
      %v989 = vpop.f32.mrf.mxu0
      %v990 = vadd.f32 %v879, %v989
      %991 = vmatmul.f32.gmra.mxu0 %v928
      %v992 = vpop.f32.mrf.mxu0
      %v993 = vadd.f32 %v879, %v992
      %994 = vdwg.mxu0
      %v995 = vmax.f32 %v948, 0.0
      %v996 = vmax.f32 %v951, 0.0
      %v997 = vmax.f32 %v954, 0.0
      %v998 = vmax.f32 %v957, 0.0
      %v999 = vmax.f32 %v960, 0.0
      %v1000 = vmax.f32 %v963, 0.0
      %v1001 = vmax.f32 %v966, 0.0
      %v1002 = vmax.f32 %v969, 0.0
      %v1003 = vmax.f32 %v972, 0.0
      %v1004 = vmax.f32 %v975, 0.0
      %v1005 = vmax.f32 %v978, 0.0
      %v1006 = vmax.f32 %v981, 0.0
      %v1007 = vmax.f32 %v984, 0.0
      %v1008 = vmax.f32 %v987, 0.0
      %v1009 = vmax.f32 %v990, 0.0
      %v1010 = vmax.f32 %v993, 0.0
      %v1011 = vld [vmem:[%s9] sm:$0xff]
      %v1012 = vld [vmem:[%s9 + $0x8] sm:$0xff]
      %v1013 = vld [vmem:[%s10] sm:$0x1]
      %v1015 = vperm.slane %v1013, 0
      %v1018 = vsel %vm746, %v995, 0
      %v1021 = vsel %vm746, %v996, 0
      %v1024 = vsel %vm746, %v997, 0
      %v1027 = vsel %vm746, %v998, 0
      %v1030 = vsel %vm746, %v999, 0
      %v1033 = vsel %vm746, %v1000, 0
      %v1036 = vsel %vm746, %v1001, 0
      %v1039 = vsel %vm746, %v1002, 0
      %v1042 = vsel %vm746, %v1003, 0
      %v1045 = vsel %vm746, %v1004, 0
      %v1048 = vsel %vm746, %v1005, 0
      %v1051 = vsel %vm746, %v1006, 0
      %v1054 = vsel %vm746, %v1007, 0
      %v1057 = vsel %vm746, %v1008, 0
      %v1060 = vsel %vm746, %v1009, 0
      %v1063 = vsel %vm746, %v1010, 0
      %1065 = vmatpush.msra.mxu0 0.0
      %1066 = vmatpush.msra.mxu0 0.0
      %1067 = vmatpush.msra.mxu0 0.0
      %1068 = vmatpush.msra.mxu0 0.0
      %1069 = vmatpush.msra.mxu0 0.0
      %1070 = vmatpush.msra.mxu0 0.0
      %1071 = vmatpush.msra.mxu0 0.0
      %1072 = vmatpush.msra.mxu0 0.0
      %1073 = vmatpush.msra.mxu0 0.0
      %1074 = vmatpush.msra.mxu0 0.0
      %1075 = vmatpush.msra.mxu0 0.0
      %1076 = vmatpush.msra.mxu0 0.0
      %1077 = vmatpush.msra.mxu0 0.0
      %1078 = vmatpush.msra.mxu0 0.0
      %1079 = vmatpush.msra.mxu0 %v1012
      %1080 = vmatpush.msra.mxu0 %v1011
      %1081 = vmatmul.f32.gmra.mxu0 %v1018
      %v1082 = vpop.f32.mrf.mxu0
      %v1083 = vadd.f32 %v1015, %v1082
      %1084 = vmatmul.f32.gmra.mxu0 %v1021
      %v1085 = vpop.f32.mrf.mxu0
      %v1086 = vadd.f32 %v1015, %v1085
      %1087 = vmatmul.f32.gmra.mxu0 %v1024
      %v1088 = vpop.f32.mrf.mxu0
      %v1089 = vadd.f32 %v1015, %v1088
      %1090 = vmatmul.f32.gmra.mxu0 %v1027
      %v1091 = vpop.f32.mrf.mxu0
      %v1092 = vadd.f32 %v1015, %v1091
      %1093 = vmatmul.f32.gmra.mxu0 %v1030
      %v1094 = vpop.f32.mrf.mxu0
      %v1095 = vadd.f32 %v1015, %v1094
      %1096 = vmatmul.f32.gmra.mxu0 %v1033
      %v1097 = vpop.f32.mrf.mxu0
      %v1098 = vadd.f32 %v1015, %v1097
      %1099 = vmatmul.f32.gmra.mxu0 %v1036
      %v1100 = vpop.f32.mrf.mxu0
      %v1101 = vadd.f32 %v1015, %v1100
      %1102 = vmatmul.f32.gmra.mxu0 %v1039
      %v1103 = vpop.f32.mrf.mxu0
      %v1104 = vadd.f32 %v1015, %v1103
      %1105 = vmatmul.f32.gmra.mxu0 %v1042
      %v1106 = vpop.f32.mrf.mxu0
      %v1107 = vadd.f32 %v1015, %v1106
      %1108 = vmatmul.f32.gmra.mxu0 %v1045
      %v1109 = vpop.f32.mrf.mxu0
      %v1110 = vadd.f32 %v1015, %v1109
      %1111 = vmatmul.f32.gmra.mxu0 %v1048
      %v1112 = vpop.f32.mrf.mxu0
      %v1113 = vadd.f32 %v1015, %v1112
      %1114 = vmatmul.f32.gmra.mxu0 %v1051
      %v1115 = vpop.f32.mrf.mxu0
      %v1116 = vadd.f32 %v1015, %v1115
      %1117 = vmatmul.f32.gmra.mxu0 %v1054
      %v1118 = vpop.f32.mrf.mxu0
      %v1119 = vadd.f32 %v1015, %v1118
      %1120 = vmatmul.f32.gmra.mxu0 %v1057
      %v1121 = vpop.f32.mrf.mxu0
      %v1122 = vadd.f32 %v1015, %v1121
      %1123 = vmatmul.f32.gmra.mxu0 %v1060
      %v1124 = vpop.f32.mrf.mxu0
      %v1125 = vadd.f32 %v1015, %v1124
      %1126 = vmatmul.f32.gmra.mxu0 %v1063
      %v1127 = vpop.f32.mrf.mxu0
      %v1128 = vadd.f32 %v1015, %v1127
      %1129 = vdwg.mxu0
      %v1130 = vmax.f32 %v1083, 0.0
      %v1131 = vmax.f32 %v1086, 0.0
      %v1132 = vmax.f32 %v1089, 0.0
      %v1133 = vmax.f32 %v1092, 0.0
      %v1134 = vmax.f32 %v1095, 0.0
      %v1135 = vmax.f32 %v1098, 0.0
      %v1136 = vmax.f32 %v1101, 0.0
      %v1137 = vmax.f32 %v1104, 0.0
      %v1138 = vmax.f32 %v1107, 0.0
      %v1139 = vmax.f32 %v1110, 0.0
      %v1140 = vmax.f32 %v1113, 0.0
      %v1141 = vmax.f32 %v1116, 0.0
      %v1142 = vmax.f32 %v1119, 0.0
      %v1143 = vmax.f32 %v1122, 0.0
      %v1144 = vmax.f32 %v1125, 0.0
      %v1145 = vmax.f32 %v1128, 0.0
      %v1146 = vld [vmem:[%s11] sm:$0xff]
      %v1147 = vld [vmem:[%s11 + $0x8] sm:$0xff]
      %v1148 = vld [vmem:[%s11 + $0x10] sm:$0xff]
      %v1149 = vld [vmem:[%s11 + $0x18] sm:$0xff]
      %v1150 = vld [vmem:[%s12] sm:$0x1]
      %v1152 = vperm.slane %v1150, 0
      %v1155 = vsel %vm610, %v1130, 0
      %v1158 = vsel %vm610, %v1131, 0
      %v1161 = vsel %vm610, %v1132, 0
      %v1164 = vsel %vm610, %v1133, 0
      %v1167 = vsel %vm610, %v1134, 0
      %v1170 = vsel %vm610, %v1135, 0
      %v1173 = vsel %vm610, %v1136, 0
      %v1176 = vsel %vm610, %v1137, 0
      %v1179 = vsel %vm610, %v1138, 0
      %v1182 = vsel %vm610, %v1139, 0
      %v1185 = vsel %vm610, %v1140, 0
      %v1188 = vsel %vm610, %v1141, 0
      %v1191 = vsel %vm610, %v1142, 0
      %v1194 = vsel %vm610, %v1143, 0
      %v1197 = vsel %vm610, %v1144, 0
      %v1200 = vsel %vm610, %v1145, 0
      %1202 = vmatpush.msra.mxu0 0.0
      %1203 = vmatpush.msra.mxu0 0.0
      %1204 = vmatpush.msra.mxu0 0.0
      %1205 = vmatpush.msra.mxu0 0.0
      %1206 = vmatpush.msra.mxu0 0.0
      %1207 = vmatpush.msra.mxu0 0.0
      %1208 = vmatpush.msra.mxu0 0.0
      %1209 = vmatpush.msra.mxu0 0.0
      %1210 = vmatpush.msra.mxu0 0.0
      %1211 = vmatpush.msra.mxu0 0.0
      %1212 = vmatpush.msra.mxu0 0.0
      %1213 = vmatpush.msra.mxu0 0.0
      %1214 = vmatpush.msra.mxu0 %v1149
      %1215 = vmatpush.msra.mxu0 %v1148
      %1216 = vmatpush.msra.mxu0 %v1147
      %1217 = vmatpush.msra.mxu0 %v1146
      %1218 = vmatmul.f32.gmra.mxu0 %v1155
      %v1219 = vpop.f32.mrf.mxu0
      %v1220 = vadd.f32 %v1152, %v1219
      %1221 = vmatmul.f32.gmra.mxu0 %v1158
      %v1222 = vpop.f32.mrf.mxu0
      %v1223 = vadd.f32 %v1152, %v1222
      %1224 = vmatmul.f32.gmra.mxu0 %v1161
      %v1225 = vpop.f32.mrf.mxu0
      %v1226 = vadd.f32 %v1152, %v1225
      %1227 = vmatmul.f32.gmra.mxu0 %v1164
      %v1228 = vpop.f32.mrf.mxu0
      %v1229 = vadd.f32 %v1152, %v1228
      %1230 = vmatmul.f32.gmra.mxu0 %v1167
      %v1231 = vpop.f32.mrf.mxu0
      %v1232 = vadd.f32 %v1152, %v1231
      %1233 = vmatmul.f32.gmra.mxu0 %v1170
      %v1234 = vpop.f32.mrf.mxu0
      %v1235 = vadd.f32 %v1152, %v1234
      %1236 = vmatmul.f32.gmra.mxu0 %v1173
      %v1237 = vpop.f32.mrf.mxu0
      %v1238 = vadd.f32 %v1152, %v1237
      %1239 = vmatmul.f32.gmra.mxu0 %v1176
      %v1240 = vpop.f32.mrf.mxu0
      %v1241 = vadd.f32 %v1152, %v1240
      %1242 = vmatmul.f32.gmra.mxu0 %v1179
      %v1243 = vpop.f32.mrf.mxu0
      %v1244 = vadd.f32 %v1152, %v1243
      %1245 = vmatmul.f32.gmra.mxu0 %v1182
      %v1246 = vpop.f32.mrf.mxu0
      %v1247 = vadd.f32 %v1152, %v1246
      %1248 = vmatmul.f32.gmra.mxu0 %v1185
      %v1249 = vpop.f32.mrf.mxu0
      %v1250 = vadd.f32 %v1152, %v1249
      %1251 = vmatmul.f32.gmra.mxu0 %v1188
      %v1252 = vpop.f32.mrf.mxu0
      %v1253 = vadd.f32 %v1152, %v1252
      %1254 = vmatmul.f32.gmra.mxu0 %v1191
      %v1255 = vpop.f32.mrf.mxu0
      %v1256 = vadd.f32 %v1152, %v1255
      %1257 = vmatmul.f32.gmra.mxu0 %v1194
      %v1258 = vpop.f32.mrf.mxu0
      %v1259 = vadd.f32 %v1152, %v1258
      %1260 = vmatmul.f32.gmra.mxu0 %v1197
      %v1261 = vpop.f32.mrf.mxu0
      %v1262 = vadd.f32 %v1152, %v1261
      %1263 = vmatmul.f32.gmra.mxu0 %v1200
      %v1264 = vpop.f32.mrf.mxu0
      %v1265 = vadd.f32 %v1152, %v1264
      %1266 = vdwg.mxu0
      %v1267 = vxor.u32 %v1220, 2147483648
      %v1268 = vxor.u32 %v1223, 2147483648
      %v1269 = vxor.u32 %v1226, 2147483648
      %v1270 = vxor.u32 %v1229, 2147483648
      %v1271 = vxor.u32 %v1232, 2147483648
      %v1272 = vxor.u32 %v1235, 2147483648
      %v1273 = vxor.u32 %v1238, 2147483648
      %v1274 = vxor.u32 %v1241, 2147483648
      %v1275 = vxor.u32 %v1244, 2147483648
      %v1276 = vxor.u32 %v1247, 2147483648
      %v1277 = vxor.u32 %v1250, 2147483648
      %v1278 = vxor.u32 %v1253, 2147483648
      %v1279 = vxor.u32 %v1256, 2147483648
      %v1280 = vxor.u32 %v1259, 2147483648
      %v1281 = vxor.u32 %v1262, 2147483648
      %v1282 = vxor.u32 %v1265, 2147483648
      %v1283 = vmul.f32 %v1267, 1.442695
      %v1284 = vpow.pop %v1283
      %v1285 = vmul.f32 %v1268, 1.442695
      %v1286 = vpow.pop %v1285
      %v1287 = vmul.f32 %v1269, 1.442695
      %v1288 = vpow.pop %v1287
      %v1289 = vmul.f32 %v1270, 1.442695
      %v1290 = vpow.pop %v1289
      %v1291 = vmul.f32 %v1271, 1.442695
      %v1292 = vpow.pop %v1291
      %v1293 = vmul.f32 %v1272, 1.442695
      %v1294 = vpow.pop %v1293
      %v1295 = vmul.f32 %v1273, 1.442695
      %v1296 = vpow.pop %v1295
      %v1297 = vmul.f32 %v1274, 1.442695
      %v1298 = vpow.pop %v1297
      %v1299 = vmul.f32 %v1275, 1.442695
      %v1300 = vpow.pop %v1299
      %v1301 = vmul.f32 %v1276, 1.442695
      %v1302 = vpow.pop %v1301
      %v1303 = vmul.f32 %v1277, 1.442695
      %v1304 = vpow.pop %v1303
      %v1305 = vmul.f32 %v1278, 1.442695
      %v1306 = vpow.pop %v1305
      %v1307 = vmul.f32 %v1279, 1.442695
      %v1308 = vpow.pop %v1307
      %v1309 = vmul.f32 %v1280, 1.442695
      %v1310 = vpow.pop %v1309
      %v1311 = vmul.f32 %v1281, 1.442695
      %v1312 = vpow.pop %v1311
      %v1313 = vmul.f32 %v1282, 1.442695
      %v1314 = vpow.pop %v1313
      %v1315 = vadd.f32 %v1284, 1.0
      %v1316 = vadd.f32 %v1286, 1.0
      %v1317 = vadd.f32 %v1288, 1.0
      %v1318 = vadd.f32 %v1290, 1.0
      %v1319 = vadd.f32 %v1292, 1.0
      %v1320 = vadd.f32 %v1294, 1.0
      %v1321 = vadd.f32 %v1296, 1.0
      %v1322 = vadd.f32 %v1298, 1.0
      %v1323 = vadd.f32 %v1300, 1.0
      %v1324 = vadd.f32 %v1302, 1.0
      %v1325 = vadd.f32 %v1304, 1.0
      %v1326 = vadd.f32 %v1306, 1.0
      %v1327 = vadd.f32 %v1308, 1.0
      %v1328 = vadd.f32 %v1310, 1.0
      %v1329 = vadd.f32 %v1312, 1.0
      %v1330 = vadd.f32 %v1314, 1.0
      %v1331 = vrcp.pop %v1315
      %v1332 = vmul.f32 %v1315, %v1331
      %v1333 = vsub.f32 1.0, %v1332
      %v1334 = vmul.f32 %v1331, %v1333
      %v1335 = vadd.f32 %v1331, %v1334
      %vm1336 = vweird.f32 %v1315
      %vm1337 = vweird.f32 %v1331
      %vm1338 = vmor %vm1336, %vm1337
      %v1339 = vsel %vm1338, %v1331, %v1335
      %v1340 = vand.u32 2147483647, %v1315
      %vm1341 = vcmp.eq.f32.partialorder %v1340, 8.507059e+37
      %v1342 = vand.u32 %v1315, 2147483648
      %v1343 = vor.u32 1.1754944e-38, %v1342
      %v1344 = vsel %vm1341, %v1343, %v1339
      %v1345 = vmul.f32 1.0, %v1344
      %v1346 = vrcp.pop %v1316
      %v1347 = vmul.f32 %v1316, %v1346
      %v1348 = vsub.f32 1.0, %v1347
      %v1349 = vmul.f32 %v1346, %v1348
      %v1350 = vadd.f32 %v1346, %v1349
      %vm1351 = vweird.f32 %v1316
      %vm1352 = vweird.f32 %v1346
      %vm1353 = vmor %vm1351, %vm1352
      %v1354 = vsel %vm1353, %v1346, %v1350
      %v1355 = vand.u32 2147483647, %v1316
      %vm1356 = vcmp.eq.f32.partialorder %v1355, 8.507059e+37
      %v1357 = vand.u32 %v1316, 2147483648
      %v1358 = vor.u32 1.1754944e-38, %v1357
      %v1359 = vsel %vm1356, %v1358, %v1354
      %v1360 = vmul.f32 1.0, %v1359
      %v1361 = vrcp.pop %v1317
      %v1362 = vmul.f32 %v1317, %v1361
      %v1363 = vsub.f32 1.0, %v1362
      %v1364 = vmul.f32 %v1361, %v1363
      %v1365 = vadd.f32 %v1361, %v1364
      %vm1366 = vweird.f32 %v1317
      %vm1367 = vweird.f32 %v1361
      %vm1368 = vmor %vm1366, %vm1367
      %v1369 = vsel %vm1368, %v1361, %v1365
      %v1370 = vand.u32 2147483647, %v1317
      %vm1371 = vcmp.eq.f32.partialorder %v1370, 8.507059e+37
      %v1372 = vand.u32 %v1317, 2147483648
      %v1373 = vor.u32 1.1754944e-38, %v1372
      %v1374 = vsel %vm1371, %v1373, %v1369
      %v1375 = vmul.f32 1.0, %v1374
      %v1376 = vrcp.pop %v1318
      %v1377 = vmul.f32 %v1318, %v1376
      %v1378 = vsub.f32 1.0, %v1377
      %v1379 = vmul.f32 %v1376, %v1378
      %v1380 = vadd.f32 %v1376, %v1379
      %vm1381 = vweird.f32 %v1318
      %vm1382 = vweird.f32 %v1376
      %vm1383 = vmor %vm1381, %vm1382
      %v1384 = vsel %vm1383, %v1376, %v1380
      %v1385 = vand.u32 2147483647, %v1318
      %vm1386 = vcmp.eq.f32.partialorder %v1385, 8.507059e+37
      %v1387 = vand.u32 %v1318, 2147483648
      %v1388 = vor.u32 1.1754944e-38, %v1387
      %v1389 = vsel %vm1386, %v1388, %v1384
      %v1390 = vmul.f32 1.0, %v1389
      %v1391 = vrcp.pop %v1319
      %v1392 = vmul.f32 %v1319, %v1391
      %v1393 = vsub.f32 1.0, %v1392
      %v1394 = vmul.f32 %v1391, %v1393
      %v1395 = vadd.f32 %v1391, %v1394
      %vm1396 = vweird.f32 %v1319
      %vm1397 = vweird.f32 %v1391
      %vm1398 = vmor %vm1396, %vm1397
      %v1399 = vsel %vm1398, %v1391, %v1395
      %v1400 = vand.u32 2147483647, %v1319
      %vm1401 = vcmp.eq.f32.partialorder %v1400, 8.507059e+37
      %v1402 = vand.u32 %v1319, 2147483648
      %v1403 = vor.u32 1.1754944e-38, %v1402
      %v1404 = vsel %vm1401, %v1403, %v1399
      %v1405 = vmul.f32 1.0, %v1404
      %v1406 = vrcp.pop %v1320
      %v1407 = vmul.f32 %v1320, %v1406
      %v1408 = vsub.f32 1.0, %v1407
      %v1409 = vmul.f32 %v1406, %v1408
      %v1410 = vadd.f32 %v1406, %v1409
      %vm1411 = vweird.f32 %v1320
      %vm1412 = vweird.f32 %v1406
      %vm1413 = vmor %vm1411, %vm1412
      %v1414 = vsel %vm1413, %v1406, %v1410
      %v1415 = vand.u32 2147483647, %v1320
      %vm1416 = vcmp.eq.f32.partialorder %v1415, 8.507059e+37
      %v1417 = vand.u32 %v1320, 2147483648
      %v1418 = vor.u32 1.1754944e-38, %v1417
      %v1419 = vsel %vm1416, %v1418, %v1414
      %v1420 = vmul.f32 1.0, %v1419
      %v1421 = vrcp.pop %v1321
      %v1422 = vmul.f32 %v1321, %v1421
      %v1423 = vsub.f32 1.0, %v1422
      %v1424 = vmul.f32 %v1421, %v1423
      %v1425 = vadd.f32 %v1421, %v1424
      %vm1426 = vweird.f32 %v1321
      %vm1427 = vweird.f32 %v1421
      %vm1428 = vmor %vm1426, %vm1427
      %v1429 = vsel %vm1428, %v1421, %v1425
      %v1430 = vand.u32 2147483647, %v1321
      %vm1431 = vcmp.eq.f32.partialorder %v1430, 8.507059e+37
      %v1432 = vand.u32 %v1321, 2147483648
      %v1433 = vor.u32 1.1754944e-38, %v1432
      %v1434 = vsel %vm1431, %v1433, %v1429
      %v1435 = vmul.f32 1.0, %v1434
      %v1436 = vrcp.pop %v1322
      %v1437 = vmul.f32 %v1322, %v1436
      %v1438 = vsub.f32 1.0, %v1437
      %v1439 = vmul.f32 %v1436, %v1438
      %v1440 = vadd.f32 %v1436, %v1439
      %vm1441 = vweird.f32 %v1322
      %vm1442 = vweird.f32 %v1436
      %vm1443 = vmor %vm1441, %vm1442
      %v1444 = vsel %vm1443, %v1436, %v1440
      %v1445 = vand.u32 2147483647, %v1322
      %vm1446 = vcmp.eq.f32.partialorder %v1445, 8.507059e+37
      %v1447 = vand.u32 %v1322, 2147483648
      %v1448 = vor.u32 1.1754944e-38, %v1447
      %v1449 = vsel %vm1446, %v1448, %v1444
      %v1450 = vmul.f32 1.0, %v1449
      %v1451 = vrcp.pop %v1323
      %v1452 = vmul.f32 %v1323, %v1451
      %v1453 = vsub.f32 1.0, %v1452
      %v1454 = vmul.f32 %v1451, %v1453
      %v1455 = vadd.f32 %v1451, %v1454
      %vm1456 = vweird.f32 %v1323
      %vm1457 = vweird.f32 %v1451
      %vm1458 = vmor %vm1456, %vm1457
      %v1459 = vsel %vm1458, %v1451, %v1455
      %v1460 = vand.u32 2147483647, %v1323
      %vm1461 = vcmp.eq.f32.partialorder %v1460, 8.507059e+37
      %v1462 = vand.u32 %v1323, 2147483648
      %v1463 = vor.u32 1.1754944e-38, %v1462
      %v1464 = vsel %vm1461, %v1463, %v1459
      %v1465 = vmul.f32 1.0, %v1464
      %v1466 = vrcp.pop %v1324
      %v1467 = vmul.f32 %v1324, %v1466
      %v1468 = vsub.f32 1.0, %v1467
      %v1469 = vmul.f32 %v1466, %v1468
      %v1470 = vadd.f32 %v1466, %v1469
      %vm1471 = vweird.f32 %v1324
      %vm1472 = vweird.f32 %v1466
      %vm1473 = vmor %vm1471, %vm1472
      %v1474 = vsel %vm1473, %v1466, %v1470
      %v1475 = vand.u32 2147483647, %v1324
      %vm1476 = vcmp.eq.f32.partialorder %v1475, 8.507059e+37
      %v1477 = vand.u32 %v1324, 2147483648
      %v1478 = vor.u32 1.1754944e-38, %v1477
      %v1479 = vsel %vm1476, %v1478, %v1474
      %v1480 = vmul.f32 1.0, %v1479
      %v1481 = vrcp.pop %v1325
      %v1482 = vmul.f32 %v1325, %v1481
      %v1483 = vsub.f32 1.0, %v1482
      %v1484 = vmul.f32 %v1481, %v1483
      %v1485 = vadd.f32 %v1481, %v1484
      %vm1486 = vweird.f32 %v1325
      %vm1487 = vweird.f32 %v1481
      %vm1488 = vmor %vm1486, %vm1487
      %v1489 = vsel %vm1488, %v1481, %v1485
      %v1490 = vand.u32 2147483647, %v1325
      %vm1491 = vcmp.eq.f32.partialorder %v1490, 8.507059e+37
      %v1492 = vand.u32 %v1325, 2147483648
      %v1493 = vor.u32 1.1754944e-38, %v1492
      %v1494 = vsel %vm1491, %v1493, %v1489
      %v1495 = vmul.f32 1.0, %v1494
      %v1496 = vrcp.pop %v1326
      %v1497 = vmul.f32 %v1326, %v1496
      %v1498 = vsub.f32 1.0, %v1497
      %v1499 = vmul.f32 %v1496, %v1498
      %v1500 = vadd.f32 %v1496, %v1499
      %vm1501 = vweird.f32 %v1326
      %vm1502 = vweird.f32 %v1496
      %vm1503 = vmor %vm1501, %vm1502
      %v1504 = vsel %vm1503, %v1496, %v1500
      %v1505 = vand.u32 2147483647, %v1326
      %vm1506 = vcmp.eq.f32.partialorder %v1505, 8.507059e+37
      %v1507 = vand.u32 %v1326, 2147483648
      %v1508 = vor.u32 1.1754944e-38, %v1507
      %v1509 = vsel %vm1506, %v1508, %v1504
      %v1510 = vmul.f32 1.0, %v1509
      %v1511 = vrcp.pop %v1327
      %v1512 = vmul.f32 %v1327, %v1511
      %v1513 = vsub.f32 1.0, %v1512
      %v1514 = vmul.f32 %v1511, %v1513
      %v1515 = vadd.f32 %v1511, %v1514
      %vm1516 = vweird.f32 %v1327
      %vm1517 = vweird.f32 %v1511
      %vm1518 = vmor %vm1516, %vm1517
      %v1519 = vsel %vm1518, %v1511, %v1515
      %v1520 = vand.u32 2147483647, %v1327
      %vm1521 = vcmp.eq.f32.partialorder %v1520, 8.507059e+37
      %v1522 = vand.u32 %v1327, 2147483648
      %v1523 = vor.u32 1.1754944e-38, %v1522
      %v1524 = vsel %vm1521, %v1523, %v1519
      %v1525 = vmul.f32 1.0, %v1524
      %v1526 = vrcp.pop %v1328
      %v1527 = vmul.f32 %v1328, %v1526
      %v1528 = vsub.f32 1.0, %v1527
      %v1529 = vmul.f32 %v1526, %v1528
      %v1530 = vadd.f32 %v1526, %v1529
      %vm1531 = vweird.f32 %v1328
      %vm1532 = vweird.f32 %v1526
      %vm1533 = vmor %vm1531, %vm1532
      %v1534 = vsel %vm1533, %v1526, %v1530
      %v1535 = vand.u32 2147483647, %v1328
      %vm1536 = vcmp.eq.f32.partialorder %v1535, 8.507059e+37
      %v1537 = vand.u32 %v1328, 2147483648
      %v1538 = vor.u32 1.1754944e-38, %v1537
      %v1539 = vsel %vm1536, %v1538, %v1534
      %v1540 = vmul.f32 1.0, %v1539
      %v1541 = vrcp.pop %v1329
      %v1542 = vmul.f32 %v1329, %v1541
      %v1543 = vsub.f32 1.0, %v1542
      %v1544 = vmul.f32 %v1541, %v1543
      %v1545 = vadd.f32 %v1541, %v1544
      %vm1546 = vweird.f32 %v1329
      %vm1547 = vweird.f32 %v1541
      %vm1548 = vmor %vm1546, %vm1547
      %v1549 = vsel %vm1548, %v1541, %v1545
      %v1550 = vand.u32 2147483647, %v1329
      %vm1551 = vcmp.eq.f32.partialorder %v1550, 8.507059e+37
      %v1552 = vand.u32 %v1329, 2147483648
      %v1553 = vor.u32 1.1754944e-38, %v1552
      %v1554 = vsel %vm1551, %v1553, %v1549
      %v1555 = vmul.f32 1.0, %v1554
      %v1556 = vrcp.pop %v1330
      %v1557 = vmul.f32 %v1330, %v1556
      %v1558 = vsub.f32 1.0, %v1557
      %v1559 = vmul.f32 %v1556, %v1558
      %v1560 = vadd.f32 %v1556, %v1559
      %vm1561 = vweird.f32 %v1330
      %vm1562 = vweird.f32 %v1556
      %vm1563 = vmor %vm1561, %vm1562
      %v1564 = vsel %vm1563, %v1556, %v1560
      %v1565 = vand.u32 2147483647, %v1330
      %vm1566 = vcmp.eq.f32.partialorder %v1565, 8.507059e+37
      %v1567 = vand.u32 %v1330, 2147483648
      %v1568 = vor.u32 1.1754944e-38, %v1567
      %v1569 = vsel %vm1566, %v1568, %v1564
      %v1570 = vmul.f32 1.0, %v1569
      %1571 = vst.msk [vmem:[%s442] sm:$0xff] %vm472, %v1345
      %1572 = vst.msk [vmem:[%s442 + $0x8] sm:$0xff] %vm472, %v1360
      %1573 = vst.msk [vmem:[%s442 + $0x10] sm:$0xff] %vm472, %v1375
      %1574 = vst.msk [vmem:[%s442 + $0x18] sm:$0xff] %vm472, %v1390
      %1575 = vst.msk [vmem:[%s442 + $0x20] sm:$0xff] %vm472, %v1405
      %1576 = vst.msk [vmem:[%s442 + $0x28] sm:$0xff] %vm472, %v1420
      %1577 = vst.msk [vmem:[%s442 + $0x30] sm:$0xff] %vm472, %v1435
      %1578 = vst.msk [vmem:[%s442 + $0x38] sm:$0xff] %vm472, %v1450
      %1579 = vst.msk [vmem:[%s442 + $0x40] sm:$0xff] %vm472, %v1465
      %1580 = vst.msk [vmem:[%s442 + $0x48] sm:$0xff] %vm472, %v1480
      %1581 = vst.msk [vmem:[%s442 + $0x50] sm:$0xff] %vm472, %v1495
      %1582 = vst.msk [vmem:[%s442 + $0x58] sm:$0xff] %vm472, %v1510
      %1583 = vst.msk [vmem:[%s442 + $0x60] sm:$0xff] %vm472, %v1525
      %1584 = vst.msk [vmem:[%s442 + $0x68] sm:$0xff] %vm472, %v1540
      %1585 = vst.msk [vmem:[%s442 + $0x70] sm:$0xff] %vm472, %v1555
      %1586 = vst.msk [vmem:[%s442 + $0x78] sm:$0xff] %vm472, %v1570
      %s1587 = smul.u32 16, %s24
      %p1588 = scmp.lt.s32.totalorder %s1587, 31
      %s1589 = scalar_select %p1588, %s1587, 31
      %s1590 = smul.addr %s1589, 8
      %s1591 = scalar_lea.vmem %s13, %s1590
      // Predicated region
      $region73: #{tpu_custom_call.1} parent=71 // pred_check
        %p1592 = pneg %p320
      $region74: #{tpu_custom_call.1} parent=71 // pred_check_branch
        %1594 = sbr.rel (%p1592) target = $region76
      $region75: #{tpu_custom_call.1} parent=71 // pred_region
        %s1595 = smul.u32 16, %s24
      $region76: #{tpu_custom_call.1} parent=71 // pred_fallthru
        _
    $region72: #{tpu_custom_call.1} parent=5 // pred_fallthru
      _
    %p1596 = scmp.le.s32.totalorder 2, %s19
    // Predicated region
    $region77: #{tpu_custom_call.1} parent=5 // pred_check
      %p1597 = pneg %p1596
    $region78: #{tpu_custom_call.1} parent=5 // pred_check_branch
      %1599 = sbr.rel (%p1597) target = $region80
    $region79: #{tpu_custom_call.1} parent=5 // pred_region
      %s1600 = ssub.s32 %s19, 2
      // Predicated region
      $region81: #{tpu_custom_call.1} parent=79 // pred_check
        %p1601 = pneg %p326
      $region82: #{tpu_custom_call.1} parent=79 // pred_check_branch
        %1603 = sbr.rel (%p1601) target = $region84
      $region83: #{tpu_custom_call.1} parent=79 // pred_region
        %s1604 = smul.u32 16, %s25
        %p1605 = scmp.lt.s32.totalorder %s1604, 31
        %s1606 = scalar_select %p1605, %s1604, 31
        %s1607 = smul.addr %s1606, 8
        %s1608 = scalar_lea.vmem %s13, %s1607
      $region84: #{tpu_custom_call.1} parent=79 // pred_fallthru
        _
    $region80: #{tpu_custom_call.1} parent=5 // pred_fallthru
      _
  $region6: #{tpu_custom_call.1} parent=0 // loop_footer
    %s23 = sadd.s32 1, %s19
  $region7: #{tpu_custom_call.1} parent=0 // loop_footer_branch
    %18 = sbr.rel target = $region3
  $region8: #{tpu_custom_call.1} parent=0 // loop_exit
    _

</llo_original>
